<compile_context>
chip_gen: v7x
topology: tpu7x:2x2x1
jax: 0.10.0
libtpu: 0.0.40
codegen_flags: <defaults>
</compile_context>

<pallas_src>
import functools

import jax
import jax.numpy as jnp
import numpy as np
from jax import lax
from jax.experimental import pallas as pl
from jax.experimental.pallas import tpu as pltpu


# ------------------------------ fused kernel -------------------------------


def _inverted_residual_kernel(*refs, stride, H, W, th_out, expand, use_res):
    """One (batch, H-tile, hidden-chunk) grid step of the fused block.

    Ref order: xpad, [w1, b1], wdw, b2, w3t, b3, out
      xpad: (1, Hp, Wp, Cin) f32   spatially zero-padded input (resident per n)
      w1  : (Cin, hc)        bf16  expand weights (this chunk), BN scale folded
      b1  : (1, hc)          f32
      wdw : (3, 3, hc)       f32   depthwise weights (this chunk), BN folded
      b2  : (1, hc)          f32
      w3t : (oup, hc)        bf16  projection weights (transposed, this chunk)
      b3  : (oup, 1)         f32
      out : (1, oup, P)      f32   P = th_out * Wo pixels, accumulated over c
    """
    it = iter(refs)
    xpad_ref = next(it)
    w1_ref = next(it) if expand else None
    b1_ref = next(it) if expand else None
    wdw_ref = next(it)
    b2_ref = next(it)
    w3t_ref = next(it)
    b3_ref = next(it)
    o_ref = next(it)

    t = pl.program_id(1)
    c = pl.program_id(2)
    n_chunks = pl.num_programs(2)

    th_in = th_out * stride
    rows = th_in + 2
    Wp = xpad_ref.shape[2]
    cin = xpad_ref.shape[3]
    hc = wdw_ref.shape[2]                       # hidden channels in this chunk
    wo = W if stride == 1 else (W - 1) // 2 + 1

    r0 = t * th_in
    if th_in & (th_in - 1) == 0:
        r0 = pl.multiple_of(r0, th_in)

    # Input rows [r0-1, r0+th_in] of the original image (padded coordinates).
    xs = xpad_ref[0, pl.ds(r0, rows), :, :]                   # (rows, Wp, cin)

    if expand:
        # 1x1 expand conv (this hidden chunk) as an MXU matmul in bf16.
        xm = xs.reshape(rows * Wp, cin).astype(jnp.bfloat16)  # free: Wp % 8 == 0
        h = jnp.dot(xm, w1_ref[...], preferred_element_type=jnp.float32)
        h = jnp.clip(h + b1_ref[...], 0.0, 6.0)               # folded-BN bias + ReLU6
        h = h.reshape(rows, Wp, hc)                           # free: Wp % 8 == 0
        # Conv zero-padding positions picked up relu6(b1); force them back to 0.
        row = lax.broadcasted_iota(jnp.int32, (rows, Wp, 1), 0) + (r0 - 1)
        col = lax.broadcasted_iota(jnp.int32, (rows, Wp, 1), 1)
        inside = (row >= 0) & (row < H) & (col >= 1) & (col <= W)
        hp = jnp.where(inside, h, 0.0)
    else:
        # expand_ratio == 1: the hidden map is x itself (padding already zero).
        hp = xs

    # 3x3 depthwise conv (weights pre-scaled by BN scale).  Column taps are
    # XLU rolls (no misaligned sublane slices); row taps are free major-axis
    # slices, pre-subsampled for stride 2 so only th_out rows are accumulated.
    wdw = wdw_ref[...]                                        # (3, 3, hc) f32
    acc = None
    for dx in range(3):
        hx = hp if dx == 0 else pltpu.roll(hp, shift=Wp - dx, axis=1)
        for dy in range(3):
            src = hx[dy:dy + th_in:stride]                    # (th_out, Wp, hc)
            contrib = src * wdw[dy:dy + 1, dx:dx + 1, :]
            acc = contrib if acc is None else acc + contrib
    acc = acc[:, 0:W:stride, :]                               # (th_out, wo, hc)

    h2 = acc.reshape(th_out * wo, hc) + b2_ref[...]
    h2 = jnp.clip(h2, 0.0, 6.0).astype(jnp.bfloat16)          # (P, hc)

    # Projection computed transposed (NT): (oup, hc) . (P, hc)^T -> (oup, P),
    # so the store is lane-dense and already NCHW-flat.
    yT = lax.dot_general(w3t_ref[...], h2,
                         dimension_numbers=(((1,), (1,)), ((), ())),
                         preferred_element_type=jnp.float32)

    # K-chunked accumulation directly in the (f32) resident output block.
    @pl.when(c == 0)
    def _():
        o_ref[...] = jnp.zeros_like(o_ref)

    o_ref[0] += yT

    @pl.when(c == n_chunks - 1)
    def _():
        extra = b3_ref[...]                                   # (oup, 1)
        if use_res:
            # Residual from the VMEM-resident input tile (no extra HBM read).
            # (P, cin) -> (cin, P) is done on the MXU via an identity NT
            # matmul (cheap, avoids an XLU relayout of the residual).
            res = xs[1:1 + th_out, 1:1 + W, :].reshape(th_out * W, cin)
            ii = lax.broadcasted_iota(jnp.int32, (cin, cin), 0)
            jj = lax.broadcasted_iota(jnp.int32, (cin, cin), 1)
            eye = jnp.where(ii == jj, 1.0, 0.0).astype(jnp.float32)
            resT = lax.dot_general(eye, res,
                                   dimension_numbers=(((1,), (1,)), ((), ())),
                                   preferred_element_type=jnp.float32)
            extra = extra + resT                              # (oup, P)
        o_ref[0] += extra


# -------------------------------- wrapper ----------------------------------


def _fold_bn(gamma, beta, mean, var, eps=1e-5):
    scale = gamma / jnp.sqrt(var + eps)
    bias = beta - mean * scale
    return scale, bias


def _pick_th_out(Ho, Wo, cap):
    """Largest tile height <= cap dividing Ho with a lane-dense (128-multiple)
    output block; fall back to the whole image only if none exists."""
    for d in range(min(cap, Ho), 0, -1):
        if Ho % d == 0 and (d * Wo) % 128 == 0:
            return d
    return Ho


def inverted_residual_pallas(x_nchw, kp, *, stride, expand_ratio,
                             th_cap=16, hc_max=256):
    """InvertedResidual forward. x is NCHW f32; returns NCHW f32."""
    N, cin, H, W = x_nchw.shape
    expand = expand_ratio != 1
    hidden = kp['wdw'].shape[-1]
    oup = kp['w3t'].shape[0]
    use_res = (stride == 1 and cin == oup)

    Ho = (H - 1) // stride + 1
    Wo = (W - 1) // stride + 1
    th_out = _pick_th_out(Ho, Wo, th_cap)
    n_tiles = Ho // th_out
    th_in = th_out * stride                    # input rows consumed per tile
    H_cover = n_tiles * th_in                  # >= H (== H+1 for odd H @ stride 2)
    Hp = H_cover + 2
    Wp = -((W + 2) // -8) * 8                  # 1 left pad, right-pad to sublane mult
    P = th_out * Wo                            # output pixels per tile (lane axis)
    rows = th_in + 2

    # Hidden-dim chunking: bounds the per-step live set.  Chunk widths must be
    # multiples of 128 (BlockSpec lane rule) unless they cover the full hidden
    # dim; zero-padding the hidden dim is exact (padded channels stay 0).
    if (not expand) or hidden <= hc_max:
        hc = hidden
    elif hidden % 256 == 0:
        hc = 256
    else:
        hc = 128
    hidden_p = -(-hidden // hc) * hc
    n_chunks = hidden_p // hc

    kp = dict(kp)
    if hidden_p != hidden:
        ph = hidden_p - hidden
        if expand:
            kp['w1'] = jnp.pad(kp['w1'], ((0, 0), (0, ph)))
            kp['b1'] = jnp.pad(kp['b1'], ((0, 0), (0, ph)))
        kp['wdw'] = jnp.pad(kp['wdw'], ((0, 0), (0, 0), (0, ph)))
        kp['b2'] = jnp.pad(kp['b2'], ((0, 0), (0, ph)))
        kp['w3t'] = jnp.pad(kp['w3t'], ((0, 0), (0, ph)))

    # Layout conversion at the module boundary (NCHW contract of the PyTorch
    # module); see TODO at the top about amortizing it across chained blocks.
    x_nhwc = jnp.transpose(x_nchw, (0, 2, 3, 1)).astype(jnp.float32)
    xpad = jnp.pad(x_nhwc, ((0, 0), (1, 1 + H_cover - H), (1, Wp - W - 1), (0, 0)))

    inputs = [xpad]
    in_specs = [pl.BlockSpec((1, Hp, Wp, cin), lambda n, t, c: (n, 0, 0, 0))]
    if expand:
        inputs += [kp['w1'], kp['b1']]
        in_specs += [pl.BlockSpec((cin, hc), lambda n, t, c: (0, c)),
                     pl.BlockSpec((1, hc), lambda n, t, c: (0, c))]
    inputs += [kp['wdw'], kp['b2'], kp['w3t'], kp['b3']]
    in_specs += [pl.BlockSpec((3, 3, hc), lambda n, t, c: (0, 0, c)),
                 pl.BlockSpec((1, hc), lambda n, t, c: (0, c)),
                 pl.BlockSpec((oup, hc), lambda n, t, c: (0, c)),
                 pl.BlockSpec((oup, 1), lambda n, t, c: (0, 0))]

    kernel = functools.partial(_inverted_residual_kernel, stride=stride, H=H,
                               W=W, th_out=th_out, expand=expand,
                               use_res=use_res)

    # VMEM budget: double-buffered blocks + per-chunk hidden working set
    # (no hardcoded 48 MiB; v7x only has 64 MiB physical VMEM).
    blk_bytes = Hp * Wp * cin * 4
    w_bytes = (9 + 1) * hc * 4 + oup * hc * 2 + oup * 4
    if expand:
        w_bytes += cin * hc * 2 + hc * 4
    out_bytes = oup * P * 4
    live = (4 * rows * Wp * hc + 2 * th_out * Wp * hc + 2 * rows * Wp * cin) * 4 \
        + 2 * P * hc * 2
    need = 2 * (blk_bytes + w_bytes + out_bytes) + live + (4 << 20)
    vmem_limit = int(min(max(need, 16 << 20), 112 << 20))

    out = pl.pallas_call(
        kernel,
        out_shape=jax.ShapeDtypeStruct((N, oup, Ho * Wo), jnp.float32),
        grid=(N, n_tiles, n_chunks),
        in_specs=in_specs,
        out_specs=pl.BlockSpec((1, oup, P), lambda n, t, c: (n, 0, t)),
        compiler_params=pltpu.CompilerParams(
            dimension_semantics=("parallel", "parallel", "arbitrary"),
            vmem_limit_bytes=vmem_limit),
    )(*inputs)

    return out.reshape(N, oup, Ho, Wo)         # already NCHW


# ------------------ deterministic parameter construction ------------------


def make_pt_params(key, inp, oup, expand_ratio):
    """Parameters in PyTorch layouts (OIHW conv weights, per-channel BN)."""
    hidden = round(inp * expand_ratio)
    ks = jax.random.split(key, 16)

    def w(k, shape, scale=0.2):
        return scale * jax.random.normal(k, shape, jnp.float32)

    def bn(k0, k1, k2, k3, ch):
        gamma = 1.0 + 0.1 * jax.random.normal(k0, (ch,), jnp.float32)
        beta = 0.1 * jax.random.normal(k1, (ch,), jnp.float32)
        mean = 0.1 * jax.random.normal(k2, (ch,), jnp.float32)
        var = jnp.abs(jax.random.normal(k3, (ch,), jnp.float32)) + 0.5
        return gamma, beta, mean, var

    p = {}
    if expand_ratio != 1:
        p['w1'] = w(ks[0], (hidden, inp, 1, 1))
        p['bn1'] = bn(ks[1], ks[2], ks[3], ks[4], hidden)
    p['wdw'] = w(ks[5], (hidden, 1, 3, 3))
    p['bn2'] = bn(ks[6], ks[7], ks[8], ks[9], hidden)
    p['w3'] = w(ks[10], (oup, hidden, 1, 1))
    p['bn3'] = bn(ks[11], ks[12], ks[13], ks[14], oup)
    return p


def to_kernel_params(p, expand_ratio, eps=1e-5):
    """Fold BN scales into conv weights; keep biases separate (f32)."""
    kp = {}
    if expand_ratio != 1:
        s1, b1 = _fold_bn(*p['bn1'], eps)
        w1 = jnp.transpose(p['w1'][:, :, 0, 0])                 # (inp, hidden)
        kp['w1'] = (w1 * s1[None, :]).astype(jnp.bfloat16)
        kp['b1'] = b1[None, :]
    s2, b2 = _fold_bn(*p['bn2'], eps)
    wdw = jnp.transpose(p['wdw'][:, 0], (1, 2, 0))              # (3, 3, hidden)
    kp['wdw'] = (wdw * s2[None, None, :]).astype(jnp.float32)
    kp['b2'] = b2[None, :]
    s3, b3 = _fold_bn(*p['bn3'], eps)
    w3t = p['w3'][:, :, 0, 0]                                   # (oup, hidden)
    kp['w3t'] = (w3t * s3[:, None]).astype(jnp.bfloat16)
    kp['b3'] = b3[:, None]
    return kp


# -------------------------- pure-JAX reference -----------------------------


def reference(x, p, *, stride, expand_ratio, eps=1e-5):
    inp = x.shape[1]
    oup = p['w3'].shape[0]
    hidden = p['wdw'].shape[0]
    use_res = stride == 1 and inp == oup
    dn = ('NCHW', 'OIHW', 'NCHW')

    def bn(h, prm):
        g, b, m, v = prm
        g, b, m, v = (t[None, :, None, None] for t in (g, b, m, v))
        return (h - m) / jnp.sqrt(v + eps) * g + b

    h = x
    if expand_ratio != 1:
        h = lax.conv_general_dilated(h, p['w1'], (1, 1), 'VALID',
                                     dimension_numbers=dn)
        h = jnp.clip(bn(h, p['bn1']), 0.0, 6.0)
    h = lax.conv_general_dilated(h, p['wdw'], (stride, stride),
                                 ((1, 1), (1, 1)), dimension_numbers=dn,
                                 feature_group_count=hidden)
    h = jnp.clip(bn(h, p['bn2']), 0.0, 6.0)
    h = lax.conv_general_dilated(h, p['w3'], (1, 1), 'VALID',
                                 dimension_numbers=dn)
    h = bn(h, p['bn3'])
    return x + h if use_res else h


# --------------------------------- main ------------------------------------


if __name__ == "__main__":
    key = jax.random.PRNGKey(0)
    k_x, k_x2, k_a, k_b, k_c, k_d = jax.random.split(key, 6)
    x4 = jax.random.normal(k_x, (2, 4, 16, 16), jnp.float32)    # NCHW
    x32 = jax.random.normal(k_x2, (2, 32, 16, 16), jnp.float32)  # NCHW

    configs = [
        # (x, inp, oup, stride, expand_ratio, param_key, wrapper kwargs)
        (x4, 4, 4, 1, 6, k_a, dict(th_cap=8)),      # residual + two H tiles (halo)
        (x4, 4, 8, 1, 1, k_b, dict()),              # expand_ratio == 1 path
        (x4, 4, 8, 2, 6, k_c, dict()),              # stride 2 (row/col subsample)
        (x32, 32, 32, 1, 6, k_d, dict(hc_max=128)),  # hidden chunking + residual
    ]
    for x, inp, oup, stride, er, kp_key, kw in configs:
        p_pt = make_pt_params(kp_key, inp, oup, er)
        kp = to_kernel_params(p_pt, er)
        out = inverted_residual_pallas(x, kp, stride=stride, expand_ratio=er, **kw)
        out = jax.block_until_ready(out)
        ref = reference(x, p_pt, stride=stride, expand_ratio=er)
        # bf16 MXU matmuls -> relaxed tolerance (review-approved).
        np.testing.assert_allclose(np.asarray(out), np.asarray(ref),
                                   rtol=5e-2, atol=5e-2)

    print("KERNEL_OK")
</pallas_src>

<mosaic_0001>
module attributes {stable_mosaic.version = 11 : i64} {
  func.func @_inverted_residual_kernel(%arg0: i32, %arg1: i32, %arg2: i32, %arg3: memref<1x18x24x4xf32, #tpu.memory_space<vmem>>, %arg4: memref<4x24xbf16, #tpu.memory_space<vmem>>, %arg5: memref<1x24xf32, #tpu.memory_space<vmem>>, %arg6: memref<3x3x24xf32, #tpu.memory_space<vmem>>, %arg7: memref<1x24xf32, #tpu.memory_space<vmem>>, %arg8: memref<4x24xbf16, #tpu.memory_space<vmem>>, %arg9: memref<4x1xf32, #tpu.memory_space<vmem>>, %arg10: memref<1x4x128xf32, #tpu.memory_space<vmem>>) attributes {dimension_semantics = [#tpu.dimension_semantics<parallel>, #tpu.dimension_semantics<parallel>, #tpu.dimension_semantics<arbitrary>], iteration_bounds = array<i64: 2, 2, 1>, scalar_prefetch = 0 : i64, scratch_operands = 0 : i64, tpu.core_type = #tpu.core_type<tc>, window_params = [{transform_indices = @transform_0, window_bounds = array<i64: 1, 18, 24, 4>}, {transform_indices = @transform_1, window_bounds = array<i64: 4, 24>}, {transform_indices = @transform_2, window_bounds = array<i64: 1, 24>}, {transform_indices = @transform_3, window_bounds = array<i64: 3, 3, 24>}, {transform_indices = @transform_4, window_bounds = array<i64: 1, 24>}, {transform_indices = @transform_5, window_bounds = array<i64: 4, 24>}, {pipeline_mode = #tpu.pipeline_mode<synchronous>, transform_indices = @transform_6, window_bounds = array<i64: 4, 1>}, {transform_indices = @transform_7, window_bounds = array<i64: 1, 4, 128>}]} {
    %c8_i32 = arith.constant 8 : i32
    %0 = arith.muli %arg1, %c8_i32 : i32
    %1 = tpu.assume_multiple %0, 8 : i32
    %c0 = arith.constant 0 : index
    %2 = arith.index_cast %1 : i32 to index
    %c0_0 = arith.constant 0 : index
    %c0_1 = arith.constant 0 : index
    %3 = vector.load %arg3[%c0, %2, %c0_0, %c0_1] : memref<1x18x24x4xf32, #tpu.memory_space<vmem>>, vector<1x10x24x4xf32>
    %4 = vector.shape_cast %3 : vector<1x10x24x4xf32> to vector<10x24x4xf32>
    %5 = vector.shape_cast %4 : vector<10x24x4xf32> to vector<240x4xf32>
    %6 = arith.truncf %5 : vector<240x4xf32> to vector<240x4xbf16>
    %c0_2 = arith.constant 0 : index
    %c0_3 = arith.constant 0 : index
    %7 = vector.load %arg4[%c0_2, %c0_3] : memref<4x24xbf16, #tpu.memory_space<vmem>>, vector<4x24xbf16>
    %cst = arith.constant dense<0.000000e+00> : vector<240x24xf32>
    %8 = tpu.matmul %6, %7, %cst {dimension_numbers = #tpu.dot_dimension_numbers<[1], [0], [0], [1], [0, 0, 1, 1], [], []>} : vector<240x4xbf16>, vector<4x24xbf16>, vector<240x24xf32> -> vector<240x24xf32>
    %c0_4 = arith.constant 0 : index
    %c0_5 = arith.constant 0 : index
    %9 = vector.load %arg5[%c0_4, %c0_5] : memref<1x24xf32, #tpu.memory_space<vmem>>, vector<1x24xf32>
    %10 = vector.broadcast %9 : vector<1x24xf32> to vector<240x24xf32>
    %11 = arith.addf %8, %10 : vector<240x24xf32>
    %cst_6 = arith.constant 0.000000e+00 : f32
    %cst_7 = arith.constant 6.000000e+00 : f32
    %12 = vector.broadcast %cst_6 : f32 to vector<240x24xf32>
    %13 = arith.maximumf %12, %11 : vector<240x24xf32>
    %14 = vector.broadcast %cst_7 : f32 to vector<240x24xf32>
    %15 = arith.minimumf %14, %13 : vector<240x24xf32>
    %16 = vector.shape_cast %15 : vector<240x24xf32> to vector<10x24x24xf32>
    %17 = tpu.iota {dimensions = array<i32: 0>} : vector<10x24x1xi32>
    %c1_i32 = arith.constant 1 : i32
    %18 = arith.subi %1, %c1_i32 : i32
    %19 = vector.broadcast %18 : i32 to vector<10x24x1xi32>
    %20 = arith.addi %17, %19 : vector<10x24x1xi32>
    %21 = tpu.iota {dimensions = array<i32: 1>} : vector<10x24x1xi32>
    %c0_i32 = arith.constant 0 : i32
    %22 = vector.broadcast %c0_i32 : i32 to vector<10x24x1xi32>
    %23 = arith.cmpi sge, %20, %22 : vector<10x24x1xi32>
    %c16_i32 = arith.constant 16 : i32
    %24 = vector.broadcast %c16_i32 : i32 to vector<10x24x1xi32>
    %25 = arith.cmpi slt, %20, %24 : vector<10x24x1xi32>
    %26 = arith.andi %23, %25 : vector<10x24x1xi1>
    %c1_i32_8 = arith.constant 1 : i32
    %27 = vector.broadcast %c1_i32_8 : i32 to vector<10x24x1xi32>
    %28 = arith.cmpi sge, %21, %27 : vector<10x24x1xi32>
    %29 = arith.andi %26, %28 : vector<10x24x1xi1>
    %c16_i32_9 = arith.constant 16 : i32
    %30 = vector.broadcast %c16_i32_9 : i32 to vector<10x24x1xi32>
    %31 = arith.cmpi sle, %21, %30 : vector<10x24x1xi32>
    %32 = arith.andi %29, %31 : vector<10x24x1xi1>
    %cst_10 = arith.constant 0.000000e+00 : f32
    %33 = vector.shape_cast %32 : vector<10x24x1xi1> to vector<10x24x1xi1>
    %34 = vector.broadcast %33 : vector<10x24x1xi1> to vector<10x24x24xi1>
    %35 = vector.broadcast %cst_10 : f32 to vector<10x24x24xf32>
    %36 = arith.select %34, %16, %35 : vector<10x24x24xi1>, vector<10x24x24xf32>
    %c0_11 = arith.constant 0 : index
    %c0_12 = arith.constant 0 : index
    %c0_13 = arith.constant 0 : index
    %37 = vector.load %arg6[%c0_11, %c0_12, %c0_13] : memref<3x3x24xf32, #tpu.memory_space<vmem>>, vector<3x3x24xf32>
    %38 = vector.extract_strided_slice %36 {offsets = [0, 0, 0], sizes = [8, 24, 24], strides = [1, 1, 1]} : vector<10x24x24xf32> to vector<8x24x24xf32>
    %39 = vector.extract_strided_slice %37 {offsets = [0, 0, 0], sizes = [1, 1, 24], strides = [1, 1, 1]} : vector<3x3x24xf32> to vector<1x1x24xf32>
    %40 = vector.broadcast %39 : vector<1x1x24xf32> to vector<8x24x24xf32>
    %41 = arith.mulf %38, %40 : vector<8x24x24xf32>
    %42 = vector.extract_strided_slice %36 {offsets = [1, 0, 0], sizes = [8, 24, 24], strides = [1, 1, 1]} : vector<10x24x24xf32> to vector<8x24x24xf32>
    %43 = vector.extract_strided_slice %37 {offsets = [1, 0, 0], sizes = [1, 1, 24], strides = [1, 1, 1]} : vector<3x3x24xf32> to vector<1x1x24xf32>
    %44 = vector.broadcast %43 : vector<1x1x24xf32> to vector<8x24x24xf32>
    %45 = arith.mulf %42, %44 : vector<8x24x24xf32>
    %46 = arith.addf %41, %45 : vector<8x24x24xf32>
    %47 = vector.extract_strided_slice %36 {offsets = [2, 0, 0], sizes = [8, 24, 24], strides = [1, 1, 1]} : vector<10x24x24xf32> to vector<8x24x24xf32>
    %48 = vector.extract_strided_slice %37 {offsets = [2, 0, 0], sizes = [1, 1, 24], strides = [1, 1, 1]} : vector<3x3x24xf32> to vector<1x1x24xf32>
    %49 = vector.broadcast %48 : vector<1x1x24xf32> to vector<8x24x24xf32>
    %50 = arith.mulf %47, %49 : vector<8x24x24xf32>
    %51 = arith.addf %46, %50 : vector<8x24x24xf32>
    %c23_i32 = arith.constant 23 : i32
    %52 = tpu.dynamic_rotate %36 by %c23_i32 dim 1 : vector<10x24x24xf32>, i32 -> vector<10x24x24xf32>
    %53 = vector.extract_strided_slice %52 {offsets = [0, 0, 0], sizes = [8, 24, 24], strides = [1, 1, 1]} : vector<10x24x24xf32> to vector<8x24x24xf32>
    %54 = vector.extract_strided_slice %37 {offsets = [0, 1, 0], sizes = [1, 1, 24], strides = [1, 1, 1]} : vector<3x3x24xf32> to vector<1x1x24xf32>
    %55 = vector.broadcast %54 : vector<1x1x24xf32> to vector<8x24x24xf32>
    %56 = arith.mulf %53, %55 : vector<8x24x24xf32>
    %57 = arith.addf %51, %56 : vector<8x24x24xf32>
    %58 = vector.extract_strided_slice %52 {offsets = [1, 0, 0], sizes = [8, 24, 24], strides = [1, 1, 1]} : vector<10x24x24xf32> to vector<8x24x24xf32>
    %59 = vector.extract_strided_slice %37 {offsets = [1, 1, 0], sizes = [1, 1, 24], strides = [1, 1, 1]} : vector<3x3x24xf32> to vector<1x1x24xf32>
    %60 = vector.broadcast %59 : vector<1x1x24xf32> to vector<8x24x24xf32>
    %61 = arith.mulf %58, %60 : vector<8x24x24xf32>
    %62 = arith.addf %57, %61 : vector<8x24x24xf32>
    %63 = vector.extract_strided_slice %52 {offsets = [2, 0, 0], sizes = [8, 24, 24], strides = [1, 1, 1]} : vector<10x24x24xf32> to vector<8x24x24xf32>
    %64 = vector.extract_strided_slice %37 {offsets = [2, 1, 0], sizes = [1, 1, 24], strides = [1, 1, 1]} : vector<3x3x24xf32> to vector<1x1x24xf32>
    %65 = vector.broadcast %64 : vector<1x1x24xf32> to vector<8x24x24xf32>
    %66 = arith.mulf %63, %65 : vector<8x24x24xf32>
    %67 = arith.addf %62, %66 : vector<8x24x24xf32>
    %c22_i32 = arith.constant 22 : i32
    %68 = tpu.dynamic_rotate %36 by %c22_i32 dim 1 : vector<10x24x24xf32>, i32 -> vector<10x24x24xf32>
    %69 = vector.extract_strided_slice %68 {offsets = [0, 0, 0], sizes = [8, 24, 24], strides = [1, 1, 1]} : vector<10x24x24xf32> to vector<8x24x24xf32>
    %70 = vector.extract_strided_slice %37 {offsets = [0, 2, 0], sizes = [1, 1, 24], strides = [1, 1, 1]} : vector<3x3x24xf32> to vector<1x1x24xf32>
    %71 = vector.broadcast %70 : vector<1x1x24xf32> to vector<8x24x24xf32>
    %72 = arith.mulf %69, %71 : vector<8x24x24xf32>
    %73 = arith.addf %67, %72 : vector<8x24x24xf32>
    %74 = vector.extract_strided_slice %68 {offsets = [1, 0, 0], sizes = [8, 24, 24], strides = [1, 1, 1]} : vector<10x24x24xf32> to vector<8x24x24xf32>
    %75 = vector.extract_strided_slice %37 {offsets = [1, 2, 0], sizes = [1, 1, 24], strides = [1, 1, 1]} : vector<3x3x24xf32> to vector<1x1x24xf32>
    %76 = vector.broadcast %75 : vector<1x1x24xf32> to vector<8x24x24xf32>
    %77 = arith.mulf %74, %76 : vector<8x24x24xf32>
    %78 = arith.addf %73, %77 : vector<8x24x24xf32>
    %79 = vector.extract_strided_slice %68 {offsets = [2, 0, 0], sizes = [8, 24, 24], strides = [1, 1, 1]} : vector<10x24x24xf32> to vector<8x24x24xf32>
    %80 = vector.extract_strided_slice %37 {offsets = [2, 2, 0], sizes = [1, 1, 24], strides = [1, 1, 1]} : vector<3x3x24xf32> to vector<1x1x24xf32>
    %81 = vector.broadcast %80 : vector<1x1x24xf32> to vector<8x24x24xf32>
    %82 = arith.mulf %79, %81 : vector<8x24x24xf32>
    %83 = arith.addf %78, %82 : vector<8x24x24xf32>
    %84 = vector.extract_strided_slice %83 {offsets = [0, 0, 0], sizes = [8, 16, 24], strides = [1, 1, 1]} : vector<8x24x24xf32> to vector<8x16x24xf32>
    %85 = vector.shape_cast %84 : vector<8x16x24xf32> to vector<128x24xf32>
    %c0_14 = arith.constant 0 : index
    %c0_15 = arith.constant 0 : index
    %86 = vector.load %arg7[%c0_14, %c0_15] : memref<1x24xf32, #tpu.memory_space<vmem>>, vector<1x24xf32>
    %87 = vector.broadcast %86 : vector<1x24xf32> to vector<128x24xf32>
    %88 = arith.addf %85, %87 : vector<128x24xf32>
    %cst_16 = arith.constant 0.000000e+00 : f32
    %cst_17 = arith.constant 6.000000e+00 : f32
    %89 = vector.broadcast %cst_16 : f32 to vector<128x24xf32>
    %90 = arith.maximumf %89, %88 : vector<128x24xf32>
    %91 = vector.broadcast %cst_17 : f32 to vector<128x24xf32>
    %92 = arith.minimumf %91, %90 : vector<128x24xf32>
    %93 = arith.truncf %92 : vector<128x24xf32> to vector<128x24xbf16>
    %c0_18 = arith.constant 0 : index
    %c0_19 = arith.constant 0 : index
    %94 = vector.load %arg8[%c0_18, %c0_19] : memref<4x24xbf16, #tpu.memory_space<vmem>>, vector<4x24xbf16>
    %cst_20 = arith.constant dense<0.000000e+00> : vector<4x128xf32>
    %95 = tpu.matmul %94, %93, %cst_20 {dimension_numbers = #tpu.dot_dimension_numbers<[1], [1], [0], [0], [0, 0, 1, 0], [], []>} : vector<4x24xbf16>, vector<128x24xbf16>, vector<4x128xf32> -> vector<4x128xf32>
    %c0_i32_21 = arith.constant 0 : i32
    %96 = arith.cmpi eq, %arg2, %c0_i32_21 : i32
    %97 = arith.extui %96 : i1 to i32
    %c0_i32_22 = arith.constant 0 : i32
    %98 = arith.cmpi ne, %97, %c0_i32_22 : i32
    scf.if %98 {
      %cst_31 = arith.constant 0.000000e+00 : f32
      %108 = vector.broadcast %cst_31 : f32 to vector<1x4x128xf32>
      %c0_32 = arith.constant 0 : index
      %c0_33 = arith.constant 0 : index
      %c0_34 = arith.constant 0 : index
      %109 = vector.load %arg10[%c0_32, %c0_33, %c0_34] : memref<1x4x128xf32, #tpu.memory_space<vmem>>, vector<1x4x128xf32>
      tpu.vector_store %arg10[%c0_32, %c0_33, %c0_34], %108 {strides = array<i32>} : memref<1x4x128xf32, #tpu.memory_space<vmem>>, vector<1x4x128xf32>,
    } else {
    }
    %c0_23 = arith.constant 0 : index
    %c0_24 = arith.constant 0 : index
    %c0_25 = arith.constant 0 : index
    %99 = vector.load %arg10[%c0_23, %c0_24, %c0_25] : memref<1x4x128xf32, #tpu.memory_space<vmem>>, vector<1x4x128xf32>
    %100 = vector.shape_cast %99 : vector<1x4x128xf32> to vector<4x128xf32>
    %101 = arith.addf %100, %95 : vector<4x128xf32>
    %c0_26 = arith.constant 0 : index
    %c0_27 = arith.constant 0 : index
    %c0_28 = arith.constant 0 : index
    %102 = vector.load %arg10[%c0_26, %c0_27, %c0_28] : memref<1x4x128xf32, #tpu.memory_space<vmem>>, vector<1x4x128xf32>
    %103 = vector.shape_cast %102 : vector<1x4x128xf32> to vector<4x128xf32>
    %104 = vector.shape_cast %101 : vector<4x128xf32> to vector<1x4x128xf32>
    tpu.vector_store %arg10[%c0_26, %c0_27, %c0_28], %104 {strides = array<i32>} : memref<1x4x128xf32, #tpu.memory_space<vmem>>, vector<1x4x128xf32>,
    %c0_i32_29 = arith.constant 0 : i32
    %105 = arith.cmpi eq, %arg2, %c0_i32_29 : i32
    %106 = arith.extui %105 : i1 to i32
    %c0_i32_30 = arith.constant 0 : i32
    %107 = arith.cmpi ne, %106, %c0_i32_30 : i32
    scf.if %107 {
      %c0_31 = arith.constant 0 : index
      %c0_32 = arith.constant 0 : index
      %108 = vector.load %arg9[%c0_31, %c0_32] : memref<4x1xf32, #tpu.memory_space<vmem>>, vector<4x1xf32>
      %109 = vector.extract_strided_slice %4 {offsets = [1, 1, 0], sizes = [8, 16, 4], strides = [1, 1, 1]} : vector<10x24x4xf32> to vector<8x16x4xf32>
      %110 = vector.shape_cast %109 : vector<8x16x4xf32> to vector<128x4xf32>
      %111 = tpu.iota {dimensions = array<i32: 0>} : vector<4x4xi32>
      %112 = tpu.iota {dimensions = array<i32: 1>} : vector<4x4xi32>
      %113 = arith.cmpi eq, %111, %112 : vector<4x4xi32>
      %cst_33 = arith.constant 1.000000e+00 : f32
      %cst_34 = arith.constant 0.000000e+00 : f32
      %114 = vector.broadcast %cst_33 : f32 to vector<4x4xf32>
      %115 = vector.broadcast %cst_34 : f32 to vector<4x4xf32>
      %116 = arith.select %113, %114, %115 : vector<4x4xi1>, vector<4x4xf32>
      %cst_35 = arith.constant dense<0.000000e+00> : vector<4x128xf32>
      %117 = tpu.matmul %116, %110, %cst_35 {dimension_numbers = #tpu.dot_dimension_numbers<[1], [1], [0], [0], [0, 0, 1, 0], [], []>} : vector<4x4xf32>, vector<128x4xf32>, vector<4x128xf32> -> vector<4x128xf32>
      %118 = vector.broadcast %108 : vector<4x1xf32> to vector<4x128xf32>
      %119 = arith.addf %118, %117 : vector<4x128xf32>
      %c0_36 = arith.constant 0 : index
      %c0_37 = arith.constant 0 : index
      %c0_38 = arith.constant 0 : index
      %120 = vector.load %arg10[%c0_36, %c0_37, %c0_38] : memref<1x4x128xf32, #tpu.memory_space<vmem>>, vector<1x4x128xf32>
      %121 = vector.shape_cast %120 : vector<1x4x128xf32> to vector<4x128xf32>
      %122 = arith.addf %121, %119 : vector<4x128xf32>
      %c0_39 = arith.constant 0 : index
      %c0_40 = arith.constant 0 : index
      %c0_41 = arith.constant 0 : index
      %123 = vector.load %arg10[%c0_39, %c0_40, %c0_41] : memref<1x4x128xf32, #tpu.memory_space<vmem>>, vector<1x4x128xf32>
      %124 = vector.shape_cast %123 : vector<1x4x128xf32> to vector<4x128xf32>
      %125 = vector.shape_cast %122 : vector<4x128xf32> to vector<1x4x128xf32>
      tpu.vector_store %arg10[%c0_39, %c0_40, %c0_41], %125 {strides = array<i32>} : memref<1x4x128xf32, #tpu.memory_space<vmem>>, vector<1x4x128xf32>,
    } else {
    }
    return
  }
  func.func @transform_0(%arg0: i32, %arg1: i32, %arg2: i32) -> (i32, i32, i32, i32) {
    %c0_i32 = arith.constant 0 : i32
    %c0_i32_0 = arith.constant 0 : i32
    %c0_i32_1 = arith.constant 0 : i32
    %c0_i32_2 = arith.constant 0 : i32
    return %arg0, %c0_i32, %c0_i32_0, %c0_i32_1 : i32, i32, i32, i32
  }
  func.func @transform_1(%arg0: i32, %arg1: i32, %arg2: i32) -> (i32, i32) {
    %c0_i32 = arith.constant 0 : i32
    %c0_i32_0 = arith.constant 0 : i32
    return %c0_i32, %arg2 : i32, i32
  }
  func.func @transform_2(%arg0: i32, %arg1: i32, %arg2: i32) -> (i32, i32) {
    %c0_i32 = arith.constant 0 : i32
    %c0_i32_0 = arith.constant 0 : i32
    return %c0_i32, %arg2 : i32, i32
  }
  func.func @transform_3(%arg0: i32, %arg1: i32, %arg2: i32) -> (i32, i32, i32) {
    %c0_i32 = arith.constant 0 : i32
    %c0_i32_0 = arith.constant 0 : i32
    %c0_i32_1 = arith.constant 0 : i32
    return %c0_i32, %c0_i32_0, %arg2 : i32, i32, i32
  }
  func.func @transform_4(%arg0: i32, %arg1: i32, %arg2: i32) -> (i32, i32) {
    %c0_i32 = arith.constant 0 : i32
    %c0_i32_0 = arith.constant 0 : i32
    return %c0_i32, %arg2 : i32, i32
  }
  func.func @transform_5(%arg0: i32, %arg1: i32, %arg2: i32) -> (i32, i32) {
    %c0_i32 = arith.constant 0 : i32
    %c0_i32_0 = arith.constant 0 : i32
    return %c0_i32, %arg2 : i32, i32
  }
  func.func @transform_6(%arg0: i32, %arg1: i32, %arg2: i32) -> (i32, i32) {
    %c0_i32 = arith.constant 0 : i32
    %c0_i32_0 = arith.constant 0 : i32
    %c0_i32_1 = arith.constant 0 : i32
    return %c0_i32, %c0_i32_0 : i32, i32
  }
  func.func @transform_7(%arg0: i32, %arg1: i32, %arg2: i32) -> (i32, i32, i32) {
    %c0_i32 = arith.constant 0 : i32
    %c0_i32_0 = arith.constant 0 : i32
    return %arg0, %c0_i32, %arg1 : i32, i32, i32
  }
}

</mosaic_0001>

<llo_original>
// kernel: tpu_custom_call.1
$region0: #{tpu_custom_call.1}
  #allocation0 [shape = 'u32[]', space=smem, size = 0x4, offset = 0x4, fixed_abs, tag = 'smem constant byte address 0x4 - core index']
  #allocation1 [shape = 'u32[144,128]{1,0:T(1,128)}', space=vmem, size = 0x12000, scoped, tag = 'internal scratch']
  %s0 = inlined_call_operand.vmem [shape: f32[2,18,24,4], index: 0, kind: input, shape index: {}]
  %s1 = inlined_call_operand.vmem [shape: bf16[4,24], index: 1, kind: input, shape index: {}]
  %s2 = inlined_call_operand.vmem [shape: f32[1,24], index: 2, kind: input, shape index: {}]
  %s3 = inlined_call_operand.vmem [shape: f32[3,3,24], index: 3, kind: input, shape index: {}]
  %s4 = inlined_call_operand.vmem [shape: f32[1,24], index: 4, kind: input, shape index: {}]
  %s5 = inlined_call_operand.vmem [shape: bf16[4,24], index: 5, kind: input, shape index: {}]
  %s6 = inlined_call_operand.vmem [shape: f32[4,1], index: 6, kind: input, shape index: {}]
  %s7 = inlined_call_operand.hbm [shape: f32[2,4,256], index: 7, kind: output, shape index: {}]
  %s8 = sld [smem:[#allocation0]]
  $region69: #{tpu_custom_call.1} parent=0
    _
  %s10 = ssub.s32 1, %s8
  %s11 = scalar_select 0, %s10, %s8
  $region1: #{tpu_custom_call.1} parent=0
    #allocation2 [shape = 'u8[4096]{0}', space=vmem, size = 0x1000, scoped, tag = 'output window, operand 0']
    #allocation3 [shape = 's32[2]{0}', space=sflag, size = 0x8, scoped, tag = 'scoped memory for tpu_custom_call.1']
    %12 = vsyncpa [#allocation3], 0
    %s13 = scalar_lea.sflag [#allocation3], 1
    %14 = vsyncpa %s13, 0
    loop: start=0, step=1, limit=6
    $region2: #{tpu_custom_call.1} parent=1 // loop_pre_header
      _
    $region3: #{tpu_custom_call.1} parent=1 // loop_header
      %s16 = sphi 0, %s20
      %p17 = scmp.ge.s32.totalorder %s16, 6
      %s23 = sphi 0, %s42
      %s24 = sphi 0, %s38
      %s25 = sphi 0, %s34
      %s26 = sphi 0, %s23
      %s27 = sphi 0, %s24
      %s28 = sphi 0, %s25
      %s29 = sphi 0, %s26
      %s30 = sphi 0, %s27
      %s31 = sphi 0, %s28
      %s45 = sphi 0, %s47
      %s48 = sphi 0, %s45
      %s49 = sphi 0, %s48
      %s65 = sphi 0, %s49
      %s71 = sphi 0, %s73
      %s74 = sphi 0, %s71
      %s75 = sphi 0, %s74
      %s91 = sphi 0, %s75
      %s97 = sphi 0, %s99
      %s100 = sphi 0, %s97
      %s101 = sphi 0, %s100
      %s117 = sphi 0, %s101
      %s123 = sphi 0, %s125
      %s126 = sphi 0, %s123
      %s127 = sphi 0, %s126
      %s143 = sphi 0, %s127
      %s149 = sphi 0, %s151
      %s152 = sphi 0, %s149
      %s153 = sphi 0, %s152
      %s169 = sphi 0, %s153
      %s175 = sphi 0, %s177
      %s178 = sphi 0, %s175
      %s179 = sphi 0, %s178
      %s195 = sphi 0, %s179
      %s199 = sphi 0, %s199
      %s201 = sphi 0, %s199
      %s202 = sphi 0, %s201
      %s216 = sphi 0, %s202
      %s224 = sphi 0, %s226
      %s227 = sphi 0, %s224
      %s228 = sphi 0, %s227
      %s244 = sphi 0, %s228
    $region4: #{tpu_custom_call.1} parent=1 // loop_header_branch
      %19 = sbr.rel (%p17) target = $region8
    $region5: #{tpu_custom_call.1} parent=1 // loop_body
      %s21 = ssub.s32 %s16, 1
      %s22 = ssub.s32 %s16, 2
      %s32 = sadd.s32 1, %s25
      %p33 = scmp.ge.s32.totalorder %s32, 1
      %s34 = scalar_select %p33, 0, %s32
      %s35 = sadd.s32 1, %s24
      %s36 = scalar_select %p33, %s35, %s24
      %p37 = scmp.ge.s32.totalorder %s36, 2
      %s38 = scalar_select %p37, 0, %s36
      %s39 = sadd.s32 1, %s23
      %s40 = scalar_select %p37, %s39, %s23
      %p41 = scmp.ge.s32.totalorder %s40, 2
      %s42 = scalar_select %p41, 0, %s40
      %s43 = ssub.s32 %s23, %s42
      %p44 = scmp.eq.s32.totalorder %s43, 0
      %s46 = sadd.s32 %s45, 1
      %s47 = scalar_select %p44, %s45, %s46
      %p50 = pneg %p44
      %p51 = scmp.eq.s32.totalorder %s16, 3
      %p52 = por %p50, %p51
      %p53 = scmp.ne.s32.totalorder %s45, %s48
      %p54 = scmp.eq.s32.totalorder %s16, 0
      %p55 = por %p53, %p54
      %p56 = scmp.ne.s32.totalorder %s45, %s48
      %p57 = scmp.eq.s32.totalorder %s21, 3
      %p58 = por %p56, %p57
      %p59 = scmp.ne.s32.totalorder %s48, %s49
      %p60 = scmp.eq.s32.totalorder %s21, 0
      %p61 = por %p59, %p60
      %p62 = scmp.ne.s32.totalorder %s48, %s49
      %p63 = scmp.eq.s32.totalorder %s22, 3
      %p64 = por %p62, %p63
      %p66 = scmp.ne.s32.totalorder %s49, %s65
      %p67 = scmp.eq.s32.totalorder %s22, 0
      %p68 = por %p66, %p67
      %s69 = ssub.s32 %s25, %s34
      %p70 = scmp.eq.s32.totalorder %s69, 0
      %s72 = sadd.s32 %s71, 1
      %s73 = scalar_select %p70, %s71, %s72
      %p76 = pneg %p70
      %p77 = scmp.eq.s32.totalorder %s16, 3
      %p78 = por %p76, %p77
      %p79 = scmp.ne.s32.totalorder %s71, %s74
      %p80 = scmp.eq.s32.totalorder %s16, 0
      %p81 = por %p79, %p80
      %p82 = scmp.ne.s32.totalorder %s71, %s74
      %p83 = scmp.eq.s32.totalorder %s21, 3
      %p84 = por %p82, %p83
      %p85 = scmp.ne.s32.totalorder %s74, %s75
      %p86 = scmp.eq.s32.totalorder %s21, 0
      %p87 = por %p85, %p86
      %p88 = scmp.ne.s32.totalorder %s74, %s75
      %p89 = scmp.eq.s32.totalorder %s22, 3
      %p90 = por %p88, %p89
      %p92 = scmp.ne.s32.totalorder %s75, %s91
      %p93 = scmp.eq.s32.totalorder %s22, 0
      %p94 = por %p92, %p93
      %s95 = ssub.s32 %s25, %s34
      %p96 = scmp.eq.s32.totalorder %s95, 0
      %s98 = sadd.s32 %s97, 1
      %s99 = scalar_select %p96, %s97, %s98
      %p102 = pneg %p96
      %p103 = scmp.eq.s32.totalorder %s16, 3
      %p104 = por %p102, %p103
      %p105 = scmp.ne.s32.totalorder %s97, %s100
      %p106 = scmp.eq.s32.totalorder %s16, 0
      %p107 = por %p105, %p106
      %p108 = scmp.ne.s32.totalorder %s97, %s100
      %p109 = scmp.eq.s32.totalorder %s21, 3
      %p110 = por %p108, %p109
      %p111 = scmp.ne.s32.totalorder %s100, %s101
      %p112 = scmp.eq.s32.totalorder %s21, 0
      %p113 = por %p111, %p112
      %p114 = scmp.ne.s32.totalorder %s100, %s101
      %p115 = scmp.eq.s32.totalorder %s22, 3
      %p116 = por %p114, %p115
      %p118 = scmp.ne.s32.totalorder %s101, %s117
      %p119 = scmp.eq.s32.totalorder %s22, 0
      %p120 = por %p118, %p119
      %s121 = ssub.s32 %s25, %s34
      %p122 = scmp.eq.s32.totalorder %s121, 0
      %s124 = sadd.s32 %s123, 1
      %s125 = scalar_select %p122, %s123, %s124
      %p128 = pneg %p122
      %p129 = scmp.eq.s32.totalorder %s16, 3
      %p130 = por %p128, %p129
      %p131 = scmp.ne.s32.totalorder %s123, %s126
      %p132 = scmp.eq.s32.totalorder %s16, 0
      %p133 = por %p131, %p132
      %p134 = scmp.ne.s32.totalorder %s123, %s126
      %p135 = scmp.eq.s32.totalorder %s21, 3
      %p136 = por %p134, %p135
      %p137 = scmp.ne.s32.totalorder %s126, %s127
      %p138 = scmp.eq.s32.totalorder %s21, 0
      %p139 = por %p137, %p138
      %p140 = scmp.ne.s32.totalorder %s126, %s127
      %p141 = scmp.eq.s32.totalorder %s22, 3
      %p142 = por %p140, %p141
      %p144 = scmp.ne.s32.totalorder %s127, %s143
      %p145 = scmp.eq.s32.totalorder %s22, 0
      %p146 = por %p144, %p145
      %s147 = ssub.s32 %s25, %s34
      %p148 = scmp.eq.s32.totalorder %s147, 0
      %s150 = sadd.s32 %s149, 1
      %s151 = scalar_select %p148, %s149, %s150
      %p154 = pneg %p148
      %p155 = scmp.eq.s32.totalorder %s16, 3
      %p156 = por %p154, %p155
      %p157 = scmp.ne.s32.totalorder %s149, %s152
      %p158 = scmp.eq.s32.totalorder %s16, 0
      %p159 = por %p157, %p158
      %p160 = scmp.ne.s32.totalorder %s149, %s152
      %p161 = scmp.eq.s32.totalorder %s21, 3
      %p162 = por %p160, %p161
      %p163 = scmp.ne.s32.totalorder %s152, %s153
      %p164 = scmp.eq.s32.totalorder %s21, 0
      %p165 = por %p163, %p164
      %p166 = scmp.ne.s32.totalorder %s152, %s153
      %p167 = scmp.eq.s32.totalorder %s22, 3
      %p168 = por %p166, %p167
      %p170 = scmp.ne.s32.totalorder %s153, %s169
      %p171 = scmp.eq.s32.totalorder %s22, 0
      %p172 = por %p170, %p171
      %s173 = ssub.s32 %s25, %s34
      %p174 = scmp.eq.s32.totalorder %s173, 0
      %s176 = sadd.s32 %s175, 1
      %s177 = scalar_select %p174, %s175, %s176
      %p180 = pneg %p174
      %p181 = scmp.eq.s32.totalorder %s16, 3
      %p182 = por %p180, %p181
      %p183 = scmp.ne.s32.totalorder %s175, %s178
      %p184 = scmp.eq.s32.totalorder %s16, 0
      %p185 = por %p183, %p184
      %p186 = scmp.ne.s32.totalorder %s175, %s178
      %p187 = scmp.eq.s32.totalorder %s21, 3
      %p188 = por %p186, %p187
      %p189 = scmp.ne.s32.totalorder %s178, %s179
      %p190 = scmp.eq.s32.totalorder %s21, 0
      %p191 = por %p189, %p190
      %p192 = scmp.ne.s32.totalorder %s178, %s179
      %p193 = scmp.eq.s32.totalorder %s22, 3
      %p194 = por %p192, %p193
      %p196 = scmp.ne.s32.totalorder %s179, %s195
      %p197 = scmp.eq.s32.totalorder %s22, 0
      %p198 = por %p196, %p197
      %s200 = sadd.s32 %s199, 1
      %p203 = scmp.eq.s32.totalorder %s16, 3
      %p204 = scmp.ne.s32.totalorder %s199, %s201
      %p205 = scmp.eq.s32.totalorder %s16, 0
      %p206 = por %p204, %p205
      %p207 = scmp.ne.s32.totalorder %s199, %s201
      %p208 = scmp.eq.s32.totalorder %s21, 3
      %p209 = por %p207, %p208
      %p210 = scmp.ne.s32.totalorder %s201, %s202
      %p211 = scmp.eq.s32.totalorder %s21, 0
      %p212 = por %p210, %p211
      %p213 = scmp.ne.s32.totalorder %s201, %s202
      %p214 = scmp.eq.s32.totalorder %s22, 3
      %p215 = por %p213, %p214
      %p217 = scmp.ne.s32.totalorder %s202, %s216
      %p218 = scmp.eq.s32.totalorder %s22, 0
      %p219 = por %p217, %p218
      %s220 = ssub.s32 %s23, %s42
      %s221 = ssub.s32 %s24, %s38
      %s222 = sor.u32 %s220, %s221
      %p223 = scmp.eq.s32.totalorder %s222, 0
      %s225 = sadd.s32 %s224, 1
      %s226 = scalar_select %p223, %s224, %s225
      %p229 = pneg %p223
      %p230 = scmp.eq.s32.totalorder %s16, 3
      %p231 = por %p229, %p230
      %p232 = scmp.ne.s32.totalorder %s224, %s227
      %p233 = scmp.eq.s32.totalorder %s16, 0
      %p234 = por %p232, %p233
      %p235 = scmp.ne.s32.totalorder %s224, %s227
      %p236 = scmp.eq.s32.totalorder %s21, 3
      %p237 = por %p235, %p236
      %p238 = scmp.ne.s32.totalorder %s227, %s228
      %p239 = scmp.eq.s32.totalorder %s21, 0
      %p240 = por %p238, %p239
      %p241 = scmp.ne.s32.totalorder %s227, %s228
      %p242 = scmp.eq.s32.totalorder %s22, 3
      %p243 = por %p241, %p242
      %p245 = scmp.ne.s32.totalorder %s228, %s244
      %p246 = scmp.eq.s32.totalorder %s22, 0
      %p247 = por %p245, %p246
      %p248 = scmp.le.s32.totalorder 1, %s16
      %p249 = scmp.lt.s32.totalorder %s16, 5
      %p250 = pnand %p248, %p249
      %p251 = pneg %p250
      // Predicated region
      $region9: #{tpu_custom_call.1} parent=5 // pred_check
        _
      $region10: #{tpu_custom_call.1} parent=5 // pred_check_branch
        %253 = sbr.rel (%p250) target = $region12
      $region11: #{tpu_custom_call.1} parent=5 // pred_region
        %s254 = ssub.s32 %s16, 1
        // Predicated region
        $region13: #{tpu_custom_call.1} parent=11 // pred_check
          %p255 = pneg %p87
        $region14: #{tpu_custom_call.1} parent=11 // pred_check_branch
          %257 = sbr.rel (%p255) target = $region16
        $region15: #{tpu_custom_call.1} parent=11 // pred_region
          %p258 = scmp.lt.s32.totalorder %s28, 0
          %s259 = scalar_select %p258, %s28, 0
          %s260 = smul.addr %s259, 2
          %s261 = scalar_lea.vmem %s1, %s260
        $region16: #{tpu_custom_call.1} parent=11 // pred_fallthru
          _
        // Predicated region
        $region17: #{tpu_custom_call.1} parent=11 // pred_check
          %p262 = pneg %p113
        $region18: #{tpu_custom_call.1} parent=11 // pred_check_branch
          %264 = sbr.rel (%p262) target = $region20
        $region19: #{tpu_custom_call.1} parent=11 // pred_region
          %p265 = scmp.lt.s32.totalorder %s28, 0
          %s266 = scalar_select %p265, %s28, 0
          %s267 = scalar_lea.vmem %s2, %s266
        $region20: #{tpu_custom_call.1} parent=11 // pred_fallthru
          _
        // Predicated region
        $region21: #{tpu_custom_call.1} parent=11 // pred_check
          %p268 = pneg %p139
        $region22: #{tpu_custom_call.1} parent=11 // pred_check_branch
          %270 = sbr.rel (%p268) target = $region24
        $region23: #{tpu_custom_call.1} parent=11 // pred_region
          %p271 = scmp.lt.s32.totalorder %s28, 0
          %s272 = scalar_select %p271, %s28, 0
          %s273 = smul.addr %s272, 4
          %s274 = scalar_lea.vmem %s3, %s273
        $region24: #{tpu_custom_call.1} parent=11 // pred_fallthru
          _
        // Predicated region
        $region25: #{tpu_custom_call.1} parent=11 // pred_check
          %p275 = pneg %p165
        $region26: #{tpu_custom_call.1} parent=11 // pred_check_branch
          %277 = sbr.rel (%p275) target = $region28
        $region27: #{tpu_custom_call.1} parent=11 // pred_region
          %p278 = scmp.lt.s32.totalorder %s28, 0
          %s279 = scalar_select %p278, %s28, 0
          %s280 = scalar_lea.vmem %s4, %s279
        $region28: #{tpu_custom_call.1} parent=11 // pred_fallthru
          _
        // Predicated region
        $region29: #{tpu_custom_call.1} parent=11 // pred_check
          %p281 = pneg %p191
        $region30: #{tpu_custom_call.1} parent=11 // pred_check_branch
          %283 = sbr.rel (%p281) target = $region32
        $region31: #{tpu_custom_call.1} parent=11 // pred_region
          %p284 = scmp.lt.s32.totalorder %s28, 0
          %s285 = scalar_select %p284, %s28, 0
          %s286 = smul.addr %s285, 2
          %s287 = scalar_lea.vmem %s5, %s286
        $region32: #{tpu_custom_call.1} parent=11 // pred_fallthru
          _
        // Predicated region
        $region33: #{tpu_custom_call.1} parent=11 // pred_check
          %p288 = pneg %p212
        $region34: #{tpu_custom_call.1} parent=11 // pred_check_branch
          %290 = sbr.rel (%p288) target = $region36
        $region35: #{tpu_custom_call.1} parent=11 // pred_region
          _
        $region36: #{tpu_custom_call.1} parent=11 // pred_fallthru
          _
      $region12: #{tpu_custom_call.1} parent=5 // pred_fallthru
        _
      %p291 = scmp.lt.s32.totalorder %s16, 4
      // Predicated region
      $region37: #{tpu_custom_call.1} parent=5 // pred_check
        %p292 = pneg %p291
      $region38: #{tpu_custom_call.1} parent=5 // pred_check_branch
        %294 = sbr.rel (%p292) target = $region40
      $region39: #{tpu_custom_call.1} parent=5 // pred_region
        // Predicated region
        $region41: #{tpu_custom_call.1} parent=39 // pred_check
          %p295 = pneg %p55
        $region42: #{tpu_custom_call.1} parent=39 // pred_check_branch
          %297 = sbr.rel (%p295) target = $region44
        $region43: #{tpu_custom_call.1} parent=39 // pred_region
          %p298 = scmp.lt.s32.totalorder %s23, 1
          %s299 = scalar_select %p298, %s23, 1
          %s300 = smul.addr %s299, 54
          %s301 = smul.addr %s300, 8
          %s302 = scalar_lea.vmem %s0, %s301
        $region44: #{tpu_custom_call.1} parent=39 // pred_fallthru
          _
      $region40: #{tpu_custom_call.1} parent=5 // pred_fallthru
        _
      %p303 = scmp.le.s32.totalorder 1, %s16
      %p304 = scmp.lt.s32.totalorder %s16, 5
      %p305 = pnand %p303, %p304
      %p306 = pneg %p305
      // Predicated region
      $region45: #{tpu_custom_call.1} parent=5 // pred_check
        _
      $region46: #{tpu_custom_call.1} parent=5 // pred_check_branch
        %308 = sbr.rel (%p305) target = $region48
      $region47: #{tpu_custom_call.1} parent=5 // pred_region
        %s309 = ssub.s32 %s16, 1
        %p310 = scmp.lt.s32.totalorder %s26, 1
        %s311 = scalar_select %p310, %s26, 1
        %s312 = smul.addr %s311, 54
        %s313 = smul.addr %s312, 8
        %s314 = scalar_lea.vmem %s0, %s313
        %p315 = pneg %p61
        %p316 = pneg %p58
        %p317 = scmp.lt.s32.totalorder %s28, 0
        %s318 = scalar_select %p317, %s28, 0
        %s319 = smul.addr %s318, 2
        %s320 = scalar_lea.vmem %s1, %s319
        %p321 = pneg %p87
        %p322 = pneg %p84
        %p323 = scmp.lt.s32.totalorder %s28, 0
        %s324 = scalar_select %p323, %s28, 0
        %s325 = scalar_lea.vmem %s2, %s324
        %p326 = pneg %p113
        %p327 = pneg %p110
        %p328 = scmp.lt.s32.totalorder %s28, 0
        %s329 = scalar_select %p328, %s28, 0
        %s330 = smul.addr %s329, 4
        %s331 = scalar_lea.vmem %s3, %s330
        %p332 = pneg %p139
        %p333 = pneg %p136
        %p334 = scmp.lt.s32.totalorder %s28, 0
        %s335 = scalar_select %p334, %s28, 0
        %s336 = scalar_lea.vmem %s4, %s335
        %p337 = pneg %p165
        %p338 = pneg %p162
        %p339 = scmp.lt.s32.totalorder %s28, 0
        %s340 = scalar_select %p339, %s28, 0
        %s341 = smul.addr %s340, 2
        %s342 = scalar_lea.vmem %s5, %s341
        %p343 = pneg %p191
        %p344 = pneg %p188
        %p345 = pneg %p212
        %p346 = pneg %p209
        %p347 = pneg %p240
        %p348 = pneg %p237
        %s349 = sand.u32 %s227, 1
        %s350 = scalar_lea.sflag [#allocation3], %s349
        %s351 = sand.u32 %s227, 1
        %s352 = smul.addr %s351, 4
        %s353 = scalar_lea.vmem [#allocation2], %s352
        %p354 = scmp.lt.s32.totalorder %s26, 1
        %s355 = scalar_select %p354, %s26, 1
        %s356 = smul.addr %s355, 54
        %s357 = smul.addr %s356, 8
        %s358 = scalar_lea.vmem %s0, %s357
        %p359 = scmp.lt.s32.totalorder %s28, 0
        %s360 = scalar_select %p359, %s28, 0
        %s361 = smul.addr %s360, 2
        %s362 = scalar_lea.vmem %s1, %s361
        %p363 = scmp.lt.s32.totalorder %s28, 0
        %s364 = scalar_select %p363, %s28, 0
        %s365 = scalar_lea.vmem %s2, %s364
        %p366 = scmp.lt.s32.totalorder %s28, 0
        %s367 = scalar_select %p366, %s28, 0
        %s368 = smul.addr %s367, 4
        %s369 = scalar_lea.vmem %s3, %s368
        %p370 = scmp.lt.s32.totalorder %s28, 0
        %s371 = scalar_select %p370, %s28, 0
        %s372 = scalar_lea.vmem %s4, %s371
        %p373 = scmp.lt.s32.totalorder %s28, 0
        %s374 = scalar_select %p373, %s28, 0
        %s375 = smul.addr %s374, 2
        %s376 = scalar_lea.vmem %s5, %s375
        %s378 = smul.u32 %s27, 8
        %s379 = smul.u32 %s378, 24
        %s380 = scalar_lea.vmem %s358, %s379
        %v381 = vld [vmem:[%s380] sm:$0xff]
        %v382 = vld [vmem:[%s380 + $0x8] sm:$0xff]
        %v383 = vld [vmem:[%s380 + $0x10] sm:$0xff]
        %v384 = vld [vmem:[%s380 + $0x18] sm:$0xff]
        %v385 = vld [vmem:[%s380 + $0x20] sm:$0xff]
        %v386 = vld [vmem:[%s380 + $0x28] sm:$0xff]
        %v387 = vld [vmem:[%s380 + $0x30] sm:$0xff]
        %v388 = vld [vmem:[%s380 + $0x38] sm:$0xff]
        %v389 = vld [vmem:[%s380 + $0x40] sm:$0xff]
        %v390 = vld [vmem:[%s380 + $0x48] sm:$0xff]
        %v391 = vld [vmem:[%s380 + $0x50] sm:$0xff]
        %v392 = vld [vmem:[%s380 + $0x58] sm:$0xff]
        %v393 = vld [vmem:[%s380 + $0x60] sm:$0xff]
        %v394 = vld [vmem:[%s380 + $0x68] sm:$0xff]
        %v395 = vld [vmem:[%s380 + $0x70] sm:$0xff]
        %v396 = vld [vmem:[%s380 + $0x78] sm:$0xff]
        %v397 = vld [vmem:[%s380 + $0x80] sm:$0xff]
        %v398 = vld [vmem:[%s380 + $0x88] sm:$0xff]
        %v399 = vld [vmem:[%s380 + $0x90] sm:$0xff]
        %v400 = vld [vmem:[%s380 + $0x98] sm:$0xff]
        %v401 = vld [vmem:[%s380 + $0xa0] sm:$0xff]
        %v402 = vld [vmem:[%s380 + $0xa8] sm:$0xff]
        %v403 = vld [vmem:[%s380 + $0xb0] sm:$0xff]
        %v404 = vld [vmem:[%s380 + $0xb8] sm:$0xff]
        %v405 = vld [vmem:[%s380 + $0xc0] sm:$0xff]
        %v406 = vld [vmem:[%s380 + $0xc8] sm:$0xff]
        %v407 = vld [vmem:[%s380 + $0xd0] sm:$0xff]
        %v408 = vld [vmem:[%s380 + $0xd8] sm:$0xff]
        %v409 = vld [vmem:[%s380 + $0xe0] sm:$0xff]
        %v410 = vld [vmem:[%s380 + $0xe8] sm:$0xff]
        %v411 = vpack.c.bf16 %v382, %v381
        %v412 = vpack.c.bf16 %v384, %v383
        %v413 = vpack.c.bf16 %v386, %v385
        %v414 = vpack.c.bf16 %v388, %v387
        %v415 = vpack.c.bf16 %v390, %v389
        %v416 = vpack.c.bf16 %v392, %v391
        %v417 = vpack.c.bf16 %v394, %v393
        %v418 = vpack.c.bf16 %v396, %v395
        %v419 = vpack.c.bf16 %v398, %v397
        %v420 = vpack.c.bf16 %v400, %v399
        %v421 = vpack.c.bf16 %v402, %v401
        %v422 = vpack.c.bf16 %v404, %v403
        %v423 = vpack.c.bf16 %v406, %v405
        %v424 = vpack.c.bf16 %v408, %v407
        %v425 = vpack.c.bf16 %v410, %v409
        %v426 = vld [vmem:[%s362] sm:$0x3]
        %v427 = vld [vmem:[%s365] sm:$0x1]
        %v429 = vlaneseq
        %v430 = vshrl.u32 %v429, 7
        %v431 = vsub.s32 0, %v430
        %v432 = vrot.slane %v427, %v431
        %vm434 = vcmask 31744
        %v436 = vsel %vm434, %v411, 0
        %v439 = vsel %vm434, %v412, 0
        %v442 = vsel %vm434, %v413, 0
        %v445 = vsel %vm434, %v414, 0
        %v448 = vsel %vm434, %v415, 0
        %v451 = vsel %vm434, %v416, 0
        %v454 = vsel %vm434, %v417, 0
        %v457 = vsel %vm434, %v418, 0
        %v460 = vsel %vm434, %v419, 0
        %v463 = vsel %vm434, %v420, 0
        %v466 = vsel %vm434, %v421, 0
        %v469 = vsel %vm434, %v422, 0
        %v472 = vsel %vm434, %v423, 0
        %v475 = vsel %vm434, %v424, 0
        %v478 = vsel %vm434, %v425, 0
        %vm480 = vcmask 1041408
        %v482 = vsel %vm480, %v426, 0
        %484 = vmatprep.subr.bf16.mxu0 0
        %485 = vmatpush1.bf16.msra.mxu0 %v482
        %486 = vmatprep.subr.bf16.mxu0 0
        %487 = vmatpush1.bf16.msra.mxu0 0
        %488 = vmatprep.subr.bf16.mxu0 0
        %489 = vmatpush1.bf16.msra.mxu0 0
        %490 = vmatprep.subr.bf16.mxu0 0
        %491 = vmatpush1.bf16.msra.mxu0 0
        %492 = vmatprep.subr.bf16.mxu0 0
        %493 = vmatpush1.bf16.msra.mxu0 0
        %494 = vmatprep.subr.bf16.mxu0 0
        %495 = vmatpush1.bf16.msra.mxu0 0
        %496 = vmatprep.subr.bf16.mxu0 0
        %497 = vmatpush1.bf16.msra.mxu0 0
        %498 = vmatprep.subr.bf16.mxu0 0
        %499 = vmatpush1.bf16.msra.mxu0 0
        %500 = vmatprep.subr.bf16.mxu0 0
        %501 = vmatpush1.bf16.msra.mxu0 0
        %502 = vmatprep.subr.bf16.mxu0 0
        %503 = vmatpush1.bf16.msra.mxu0 0
        %504 = vmatprep.subr.bf16.mxu0 0
        %505 = vmatpush1.bf16.msra.mxu0 0
        %506 = vmatprep.subr.bf16.mxu0 0
        %507 = vmatpush1.bf16.msra.mxu0 0
        %508 = vmatprep.subr.bf16.mxu0 0
        %509 = vmatpush1.bf16.msra.mxu0 0
        %510 = vmatprep.subr.bf16.mxu0 0
        %511 = vmatpush1.bf16.msra.mxu0 0
        %512 = vmatprep.subr.bf16.mxu0 0
        %513 = vmatpush1.bf16.msra.mxu0 0
        %514 = vmatprep.subr.bf16.mxu0 0
        %515 = vmatpush1.bf16.msra.mxu0 0
        %516 = vmatprep.mubr.bf16.mxu0 0
        %517 = vmatmul.mubr.bf16.gmra.mrb[0].mxu0 %v436
        %v518 = vpop.f32.mrb[0].mxu0
        %v519 = vadd.f32 %v432, %v518
        %v520 = vpop.f32.mrb[0].mxu0
        %v521 = vpop.f32.mrb[0].mxu0
        %v522 = vadd.f32 %v432, %v521
        %v523 = vpop.f32.mrb[0].mxu0
        %524 = vmatprep.mubr.bf16.mxu0 0
        %525 = vmatmul.mubr.bf16.gmra.mrb[0].mxu0 %v439
        %v526 = vpop.f32.mrb[0].mxu0
        %v527 = vadd.f32 %v432, %v526
        %v528 = vpop.f32.mrb[0].mxu0
        %v529 = vpop.f32.mrb[0].mxu0
        %v530 = vadd.f32 %v432, %v529
        %v531 = vpop.f32.mrb[0].mxu0
        %532 = vmatprep.mubr.bf16.mxu0 0
        %533 = vmatmul.mubr.bf16.gmra.mrb[0].mxu0 %v442
        %v534 = vpop.f32.mrb[0].mxu0
        %v535 = vadd.f32 %v432, %v534
        %v536 = vpop.f32.mrb[0].mxu0
        %v537 = vpop.f32.mrb[0].mxu0
        %v538 = vadd.f32 %v432, %v537
        %v539 = vpop.f32.mrb[0].mxu0
        %540 = vmatprep.mubr.bf16.mxu0 0
        %541 = vmatmul.mubr.bf16.gmra.mrb[0].mxu0 %v445
        %v542 = vpop.f32.mrb[0].mxu0
        %v543 = vadd.f32 %v432, %v542
        %v544 = vpop.f32.mrb[0].mxu0
        %v545 = vpop.f32.mrb[0].mxu0
        %v546 = vadd.f32 %v432, %v545
        %v547 = vpop.f32.mrb[0].mxu0
        %548 = vmatprep.mubr.bf16.mxu0 0
        %549 = vmatmul.mubr.bf16.gmra.mrb[0].mxu0 %v448
        %v550 = vpop.f32.mrb[0].mxu0
        %v551 = vadd.f32 %v432, %v550
        %v552 = vpop.f32.mrb[0].mxu0
        %v553 = vpop.f32.mrb[0].mxu0
        %v554 = vadd.f32 %v432, %v553
        %v555 = vpop.f32.mrb[0].mxu0
        %556 = vmatprep.mubr.bf16.mxu0 0
        %557 = vmatmul.mubr.bf16.gmra.mrb[0].mxu0 %v451
        %v558 = vpop.f32.mrb[0].mxu0
        %v559 = vadd.f32 %v432, %v558
        %v560 = vpop.f32.mrb[0].mxu0
        %v561 = vpop.f32.mrb[0].mxu0
        %v562 = vadd.f32 %v432, %v561
        %v563 = vpop.f32.mrb[0].mxu0
        %564 = vmatprep.mubr.bf16.mxu0 0
        %565 = vmatmul.mubr.bf16.gmra.mrb[0].mxu0 %v454
        %v566 = vpop.f32.mrb[0].mxu0
        %v567 = vadd.f32 %v432, %v566
        %v568 = vpop.f32.mrb[0].mxu0
        %v569 = vpop.f32.mrb[0].mxu0
        %v570 = vadd.f32 %v432, %v569
        %v571 = vpop.f32.mrb[0].mxu0
        %572 = vmatprep.mubr.bf16.mxu0 0
        %573 = vmatmul.mubr.bf16.gmra.mrb[0].mxu0 %v457
        %v574 = vpop.f32.mrb[0].mxu0
        %v575 = vadd.f32 %v432, %v574
        %v576 = vpop.f32.mrb[0].mxu0
        %v577 = vpop.f32.mrb[0].mxu0
        %v578 = vadd.f32 %v432, %v577
        %v579 = vpop.f32.mrb[0].mxu0
        %580 = vmatprep.mubr.bf16.mxu0 0
        %581 = vmatmul.mubr.bf16.gmra.mrb[0].mxu0 %v460
        %v582 = vpop.f32.mrb[0].mxu0
        %v583 = vadd.f32 %v432, %v582
        %v584 = vpop.f32.mrb[0].mxu0
        %v585 = vpop.f32.mrb[0].mxu0
        %v586 = vadd.f32 %v432, %v585
        %v587 = vpop.f32.mrb[0].mxu0
        %588 = vmatprep.mubr.bf16.mxu0 0
        %589 = vmatmul.mubr.bf16.gmra.mrb[0].mxu0 %v463
        %v590 = vpop.f32.mrb[0].mxu0
        %v591 = vadd.f32 %v432, %v590
        %v592 = vpop.f32.mrb[0].mxu0
        %v593 = vpop.f32.mrb[0].mxu0
        %v594 = vadd.f32 %v432, %v593
        %v595 = vpop.f32.mrb[0].mxu0
        %596 = vmatprep.mubr.bf16.mxu0 0
        %597 = vmatmul.mubr.bf16.gmra.mrb[0].mxu0 %v466
        %v598 = vpop.f32.mrb[0].mxu0
        %v599 = vadd.f32 %v432, %v598
        %v600 = vpop.f32.mrb[0].mxu0
        %v601 = vpop.f32.mrb[0].mxu0
        %v602 = vadd.f32 %v432, %v601
        %v603 = vpop.f32.mrb[0].mxu0
        %604 = vmatprep.mubr.bf16.mxu0 0
        %605 = vmatmul.mubr.bf16.gmra.mrb[0].mxu0 %v469
        %v606 = vpop.f32.mrb[0].mxu0
        %v607 = vadd.f32 %v432, %v606
        %v608 = vpop.f32.mrb[0].mxu0
        %v609 = vpop.f32.mrb[0].mxu0
        %v610 = vadd.f32 %v432, %v609
        %v611 = vpop.f32.mrb[0].mxu0
        %612 = vmatprep.mubr.bf16.mxu0 0
        %613 = vmatmul.mubr.bf16.gmra.mrb[0].mxu0 %v472
        %v614 = vpop.f32.mrb[0].mxu0
        %v615 = vadd.f32 %v432, %v614
        %v616 = vpop.f32.mrb[0].mxu0
        %v617 = vpop.f32.mrb[0].mxu0
        %v618 = vadd.f32 %v432, %v617
        %v619 = vpop.f32.mrb[0].mxu0
        %620 = vmatprep.mubr.bf16.mxu0 0
        %621 = vmatmul.mubr.bf16.gmra.mrb[0].mxu0 %v475
        %v622 = vpop.f32.mrb[0].mxu0
        %v623 = vadd.f32 %v432, %v622
        %v624 = vpop.f32.mrb[0].mxu0
        %v625 = vpop.f32.mrb[0].mxu0
        %v626 = vadd.f32 %v432, %v625
        %v627 = vpop.f32.mrb[0].mxu0
        %628 = vmatprep.mubr.bf16.mxu0 0
        %629 = vmatmul.mubr.bf16.gmra.mrb[0].mxu0 %v478
        %v630 = vpop.f32.mrb[0].mxu0
        %v631 = vadd.f32 %v432, %v630
        %v632 = vpop.f32.mrb[0].mxu0
        %v633 = vpop.f32.mrb[0].mxu0
        %v634 = vadd.f32 %v432, %v633
        %v635 = vpop.f32.mrb[0].mxu0
        %636 = vdwg.mxu0
        %v637 = vmax.f32 %v519, 0.0
        %v638 = vmax.f32 %v522, 0.0
        %v639 = vmax.f32 %v527, 0.0
        %v640 = vmax.f32 %v530, 0.0
        %v641 = vmax.f32 %v535, 0.0
        %v642 = vmax.f32 %v538, 0.0
        %v643 = vmax.f32 %v543, 0.0
        %v644 = vmax.f32 %v546, 0.0
        %v645 = vmax.f32 %v551, 0.0
        %v646 = vmax.f32 %v554, 0.0
        %v647 = vmax.f32 %v559, 0.0
        %v648 = vmax.f32 %v562, 0.0
        %v649 = vmax.f32 %v567, 0.0
        %v650 = vmax.f32 %v570, 0.0
        %v651 = vmax.f32 %v575, 0.0
        %v652 = vmax.f32 %v578, 0.0
        %v653 = vmax.f32 %v583, 0.0
        %v654 = vmax.f32 %v586, 0.0
        %v655 = vmax.f32 %v591, 0.0
        %v656 = vmax.f32 %v594, 0.0
        %v657 = vmax.f32 %v599, 0.0
        %v658 = vmax.f32 %v602, 0.0
        %v659 = vmax.f32 %v607, 0.0
        %v660 = vmax.f32 %v610, 0.0
        %v661 = vmax.f32 %v615, 0.0
        %v662 = vmax.f32 %v618, 0.0
        %v663 = vmax.f32 %v623, 0.0
        %v664 = vmax.f32 %v626, 0.0
        %v665 = vmax.f32 %v631, 0.0
        %v666 = vmax.f32 %v634, 0.0
        %v667 = vmin.f32 %v637, 6.0
        %v668 = vmin.f32 %v638, 6.0
        %v669 = vmin.f32 %v639, 6.0
        %v670 = vmin.f32 %v640, 6.0
        %v671 = vmin.f32 %v641, 6.0
        %v672 = vmin.f32 %v642, 6.0
        %v673 = vmin.f32 %v643, 6.0
        %v674 = vmin.f32 %v644, 6.0
        %v675 = vmin.f32 %v645, 6.0
        %v676 = vmin.f32 %v646, 6.0
        %v677 = vmin.f32 %v647, 6.0
        %v678 = vmin.f32 %v648, 6.0
        %v679 = vmin.f32 %v649, 6.0
        %v680 = vmin.f32 %v650, 6.0
        %v681 = vmin.f32 %v651, 6.0
        %v682 = vmin.f32 %v652, 6.0
        %v683 = vmin.f32 %v653, 6.0
        %v684 = vmin.f32 %v654, 6.0
        %v685 = vmin.f32 %v655, 6.0
        %v686 = vmin.f32 %v656, 6.0
        %v687 = vmin.f32 %v657, 6.0
        %v688 = vmin.f32 %v658, 6.0
        %v689 = vmin.f32 %v659, 6.0
        %v690 = vmin.f32 %v660, 6.0
        %v691 = vmin.f32 %v661, 6.0
        %v692 = vmin.f32 %v662, 6.0
        %v693 = vmin.f32 %v663, 6.0
        %v694 = vmin.f32 %v664, 6.0
        %v695 = vmin.f32 %v665, 6.0
        %v696 = vmin.f32 %v666, 6.0
        %s697 = ssub.s32 %s378, 1
        %v698 = vstv %s697
        %v699 = vadd.s32 %v698, 1
        %v700 = vadd.s32 %v698, 2
        %v701 = vadd.s32 %v698, 3
        %v702 = vadd.s32 %v698, 4
        %v703 = vadd.s32 %v698, 5
        %v704 = vadd.s32 %v698, 6
        %v705 = vadd.s32 %v698, 7
        %v706 = vadd.s32 %v698, 8
        %v707 = vadd.s32 %v698, 9
        %v708 = vlaneseq
        %v709 = vshrl.u32 %v708, 7
        %v710 = vadd.s32 %v709, 8
        %v711 = vadd.s32 %v709, 16
        %vm712 = vcmp.ge.s32.totalorder %v698, 0
        %vm713 = vcmp.ge.s32.totalorder %v699, 0
        %vm714 = vcmp.ge.s32.totalorder %v700, 0
        %vm715 = vcmp.ge.s32.totalorder %v701, 0
        %vm716 = vcmp.ge.s32.totalorder %v702, 0
        %vm717 = vcmp.ge.s32.totalorder %v703, 0
        %vm718 = vcmp.ge.s32.totalorder %v704, 0
        %vm719 = vcmp.ge.s32.totalorder %v705, 0
        %vm720 = vcmp.ge.s32.totalorder %v706, 0
        %vm721 = vcmp.ge.s32.totalorder %v707, 0
        %vm722 = vcmp.lt.s32.totalorder %v698, 16
        %vm723 = vcmp.lt.s32.totalorder %v699, 16
        %vm724 = vcmp.lt.s32.totalorder %v700, 16
        %vm725 = vcmp.lt.s32.totalorder %v701, 16
        %vm726 = vcmp.lt.s32.totalorder %v702, 16
        %vm727 = vcmp.lt.s32.totalorder %v703, 16
        %vm728 = vcmp.lt.s32.totalorder %v704, 16
        %vm729 = vcmp.lt.s32.totalorder %v705, 16
        %vm730 = vcmp.lt.s32.totalorder %v706, 16
        %vm731 = vcmp.lt.s32.totalorder %v707, 16
        %vm732 = vmand %vm712, %vm722
        %vm733 = vmand %vm713, %vm723
        %vm734 = vmand %vm714, %vm724
        %vm735 = vmand %vm715, %vm725
        %vm736 = vmand %vm716, %vm726
        %vm737 = vmand %vm717, %vm727
        %vm738 = vmand %vm718, %vm728
        %vm739 = vmand %vm719, %vm729
        %vm740 = vmand %vm720, %vm730
        %vm741 = vmand %vm721, %vm731
        %vm742 = vcmp.ge.s32.totalorder %v709, 1
        %vm743 = vcmp.ge.s32.totalorder %v710, 1
        %vm744 = vcmp.ge.s32.totalorder %v711, 1
        %vm745 = vmand %vm732, %vm742
        %vm746 = vmand %vm732, %vm743
        %vm747 = vmand %vm732, %vm744
        %vm748 = vmand %vm733, %vm742
        %vm749 = vmand %vm733, %vm743
        %vm750 = vmand %vm733, %vm744
        %vm751 = vmand %vm734, %vm742
        %vm752 = vmand %vm734, %vm743
        %vm753 = vmand %vm734, %vm744
        %vm754 = vmand %vm735, %vm742
        %vm755 = vmand %vm735, %vm743
        %vm756 = vmand %vm735, %vm744
        %vm757 = vmand %vm736, %vm742
        %vm758 = vmand %vm736, %vm743
        %vm759 = vmand %vm736, %vm744
        %vm760 = vmand %vm737, %vm742
        %vm761 = vmand %vm737, %vm743
        %vm762 = vmand %vm737, %vm744
        %vm763 = vmand %vm738, %vm742
        %vm764 = vmand %vm738, %vm743
        %vm765 = vmand %vm738, %vm744
        %vm766 = vmand %vm739, %vm742
        %vm767 = vmand %vm739, %vm743
        %vm768 = vmand %vm739, %vm744
        %vm769 = vmand %vm740, %vm742
        %vm770 = vmand %vm740, %vm743
        %vm771 = vmand %vm740, %vm744
        %vm772 = vmand %vm741, %vm742
        %vm773 = vmand %vm741, %vm743
        %vm774 = vmand %vm741, %vm744
        %vm775 = vcmp.le.s32.totalorder %v709, 16
        %vm776 = vcmp.le.s32.totalorder %v710, 16
        %vm777 = vcmp.le.s32.totalorder %v711, 16
        %vm778 = vmand %vm745, %vm775
        %vm779 = vmand %vm746, %vm776
        %vm780 = vmand %vm747, %vm777
        %vm781 = vmand %vm748, %vm775
        %vm782 = vmand %vm749, %vm776
        %vm783 = vmand %vm750, %vm777
        %vm784 = vmand %vm751, %vm775
        %vm785 = vmand %vm752, %vm776
        %vm786 = vmand %vm753, %vm777
        %vm787 = vmand %vm754, %vm775
        %vm788 = vmand %vm755, %vm776
        %vm789 = vmand %vm756, %vm777
        %vm790 = vmand %vm757, %vm775
        %vm791 = vmand %vm758, %vm776
        %vm792 = vmand %vm759, %vm777
        %vm793 = vmand %vm760, %vm775
        %vm794 = vmand %vm761, %vm776
        %vm795 = vmand %vm762, %vm777
        %vm796 = vmand %vm763, %vm775
        %vm797 = vmand %vm764, %vm776
        %vm798 = vmand %vm765, %vm777
        %vm799 = vmand %vm766, %vm775
        %vm800 = vmand %vm767, %vm776
        %vm801 = vmand %vm768, %vm777
        %vm802 = vmand %vm769, %vm775
        %vm803 = vmand %vm770, %vm776
        %vm804 = vmand %vm771, %vm777
        %vm805 = vmand %vm772, %vm775
        %vm806 = vmand %vm773, %vm776
        %vm807 = vmand %vm774, %vm777
        %v808 = vsel %vm778, 1, 0
        %v809 = vsel %vm779, 1, 0
        %v810 = vsel %vm780, 1, 0
        %v811 = vsel %vm781, 1, 0
        %v812 = vsel %vm782, 1, 0
        %v813 = vsel %vm783, 1, 0
        %v814 = vsel %vm784, 1, 0
        %v815 = vsel %vm785, 1, 0
        %v816 = vsel %vm786, 1, 0
        %v817 = vsel %vm787, 1, 0
        %v818 = vsel %vm788, 1, 0
        %v819 = vsel %vm789, 1, 0
        %v820 = vsel %vm790, 1, 0
        %v821 = vsel %vm791, 1, 0
        %v822 = vsel %vm792, 1, 0
        %v823 = vsel %vm793, 1, 0
        %v824 = vsel %vm794, 1, 0
        %v825 = vsel %vm795, 1, 0
        %v826 = vsel %vm796, 1, 0
        %v827 = vsel %vm797, 1, 0
        %v828 = vsel %vm798, 1, 0
        %v829 = vsel %vm799, 1, 0
        %v830 = vsel %vm800, 1, 0
        %v831 = vsel %vm801, 1, 0
        %v832 = vsel %vm802, 1, 0
        %v833 = vsel %vm803, 1, 0
        %v834 = vsel %vm804, 1, 0
        %v835 = vsel %vm805, 1, 0
        %v836 = vsel %vm806, 1, 0
        %v837 = vsel %vm807, 1, 0
        %vm838 = vcmp.eq.s32.totalorder %v808, 1
        %vm839 = vcmp.eq.s32.totalorder %v809, 1
        %vm840 = vcmp.eq.s32.totalorder %v810, 1
        %vm841 = vcmp.eq.s32.totalorder %v811, 1
        %vm842 = vcmp.eq.s32.totalorder %v812, 1
        %vm843 = vcmp.eq.s32.totalorder %v813, 1
        %vm844 = vcmp.eq.s32.totalorder %v814, 1
        %vm845 = vcmp.eq.s32.totalorder %v815, 1
        %vm846 = vcmp.eq.s32.totalorder %v816, 1
        %vm847 = vcmp.eq.s32.totalorder %v817, 1
        %vm848 = vcmp.eq.s32.totalorder %v818, 1
        %vm849 = vcmp.eq.s32.totalorder %v819, 1
        %vm850 = vcmp.eq.s32.totalorder %v820, 1
        %vm851 = vcmp.eq.s32.totalorder %v821, 1
        %vm852 = vcmp.eq.s32.totalorder %v822, 1
        %vm853 = vcmp.eq.s32.totalorder %v823, 1
        %vm854 = vcmp.eq.s32.totalorder %v824, 1
        %vm855 = vcmp.eq.s32.totalorder %v825, 1
        %vm856 = vcmp.eq.s32.totalorder %v826, 1
        %vm857 = vcmp.eq.s32.totalorder %v827, 1
        %vm858 = vcmp.eq.s32.totalorder %v828, 1
        %vm859 = vcmp.eq.s32.totalorder %v829, 1
        %vm860 = vcmp.eq.s32.totalorder %v830, 1
        %vm861 = vcmp.eq.s32.totalorder %v831, 1
        %vm862 = vcmp.eq.s32.totalorder %v832, 1
        %vm863 = vcmp.eq.s32.totalorder %v833, 1
        %vm864 = vcmp.eq.s32.totalorder %v834, 1
        %vm865 = vcmp.eq.s32.totalorder %v835, 1
        %vm866 = vcmp.eq.s32.totalorder %v836, 1
        %vm867 = vcmp.eq.s32.totalorder %v837, 1
        %v868 = vsel %vm838, %v667, 0.0
        %v869 = vsel %vm839, %v668, 0.0
        %v870 = vsel %vm840, %v669, 0.0
        %v871 = vsel %vm841, %v670, 0.0
        %v872 = vsel %vm842, %v671, 0.0
        %v873 = vsel %vm843, %v672, 0.0
        %v874 = vsel %vm844, %v673, 0.0
        %v875 = vsel %vm845, %v674, 0.0
        %v876 = vsel %vm846, %v675, 0.0
        %v877 = vsel %vm847, %v676, 0.0
        %v878 = vsel %vm848, %v677, 0.0
        %v879 = vsel %vm849, %v678, 0.0
        %v880 = vsel %vm850, %v679, 0.0
        %v881 = vsel %vm851, %v680, 0.0
        %v882 = vsel %vm852, %v681, 0.0
        %v883 = vsel %vm853, %v682, 0.0
        %v884 = vsel %vm854, %v683, 0.0
        %v885 = vsel %vm855, %v684, 0.0
        %v886 = vsel %vm856, %v685, 0.0
        %v887 = vsel %vm857, %v686, 0.0
        %v888 = vsel %vm858, %v687, 0.0
        %v889 = vsel %vm859, %v688, 0.0
        %v890 = vsel %vm860, %v689, 0.0
        %v891 = vsel %vm861, %v690, 0.0
        %v892 = vsel %vm862, %v691, 0.0
        %v893 = vsel %vm863, %v692, 0.0
        %v894 = vsel %vm864, %v693, 0.0
        %v895 = vsel %vm865, %v694, 0.0
        %v896 = vsel %vm866, %v695, 0.0
        %v897 = vsel %vm867, %v696, 0.0
        %v898 = vld [vmem:[%s369] sm:$0x7]
        %v899 = vld [vmem:[%s369 + $0x4] sm:$0x7]
        %v900 = vld [vmem:[%s369 + $0x8] sm:$0x7]
        %v901 = vlaneseq
        %v902 = vshrl.u32 %v901, 7
        %v903 = vsub.s32 0, %v902
        %v904 = vrot.slane %v898, %v903
        %v905 = vmul.f32 %v868, %v904
        %v906 = vmul.f32 %v869, %v904
        %v907 = vmul.f32 %v871, %v904
        %v908 = vmul.f32 %v872, %v904
        %v909 = vmul.f32 %v874, %v904
        %v910 = vmul.f32 %v875, %v904
        %v911 = vmul.f32 %v877, %v904
        %v912 = vmul.f32 %v878, %v904
        %v913 = vmul.f32 %v880, %v904
        %v914 = vmul.f32 %v881, %v904
        %v915 = vmul.f32 %v883, %v904
        %v916 = vmul.f32 %v884, %v904
        %v917 = vmul.f32 %v886, %v904
        %v918 = vmul.f32 %v887, %v904
        %v919 = vmul.f32 %v889, %v904
        %v920 = vmul.f32 %v890, %v904
        %v921 = vlaneseq
        %v922 = vshrl.u32 %v921, 7
        %v923 = vsub.s32 0, %v922
        %v924 = vrot.slane %v899, %v923
        %v925 = vmul.f32 %v871, %v924
        %v926 = vmul.f32 %v872, %v924
        %v927 = vmul.f32 %v874, %v924
        %v928 = vmul.f32 %v875, %v924
        %v929 = vmul.f32 %v877, %v924
        %v930 = vmul.f32 %v878, %v924
        %v931 = vmul.f32 %v880, %v924
        %v932 = vmul.f32 %v881, %v924
        %v933 = vmul.f32 %v883, %v924
        %v934 = vmul.f32 %v884, %v924
        %v935 = vmul.f32 %v886, %v924
        %v936 = vmul.f32 %v887, %v924
        %v937 = vmul.f32 %v889, %v924
        %v938 = vmul.f32 %v890, %v924
        %v939 = vmul.f32 %v892, %v924
        %v940 = vmul.f32 %v893, %v924
        %v941 = vadd.f32 %v905, %v925
        %v942 = vadd.f32 %v906, %v926
        %v943 = vadd.f32 %v907, %v927
        %v944 = vadd.f32 %v908, %v928
        %v945 = vadd.f32 %v909, %v929
        %v946 = vadd.f32 %v910, %v930
        %v947 = vadd.f32 %v911, %v931
        %v948 = vadd.f32 %v912, %v932
        %v949 = vadd.f32 %v913, %v933
        %v950 = vadd.f32 %v914, %v934
        %v951 = vadd.f32 %v915, %v935
        %v952 = vadd.f32 %v916, %v936
        %v953 = vadd.f32 %v917, %v937
        %v954 = vadd.f32 %v918, %v938
        %v955 = vadd.f32 %v919, %v939
        %v956 = vadd.f32 %v920, %v940
        %v957 = vlaneseq
        %v958 = vshrl.u32 %v957, 7
        %v959 = vsub.s32 0, %v958
        %v960 = vrot.slane %v900, %v959
        %v961 = vmul.f32 %v874, %v960
        %v962 = vmul.f32 %v875, %v960
        %v963 = vmul.f32 %v877, %v960
        %v964 = vmul.f32 %v878, %v960
        %v965 = vmul.f32 %v880, %v960
        %v966 = vmul.f32 %v881, %v960
        %v967 = vmul.f32 %v883, %v960
        %v968 = vmul.f32 %v884, %v960
        %v969 = vmul.f32 %v886, %v960
        %v970 = vmul.f32 %v887, %v960
        %v971 = vmul.f32 %v889, %v960
        %v972 = vmul.f32 %v890, %v960
        %v973 = vmul.f32 %v892, %v960
        %v974 = vmul.f32 %v893, %v960
        %v975 = vmul.f32 %v895, %v960
        %v976 = vmul.f32 %v896, %v960
        %v977 = vadd.f32 %v941, %v961
        %v978 = vadd.f32 %v942, %v962
        %v979 = vadd.f32 %v943, %v963
        %v980 = vadd.f32 %v944, %v964
        %v981 = vadd.f32 %v945, %v965
        %v982 = vadd.f32 %v946, %v966
        %v983 = vadd.f32 %v947, %v967
        %v984 = vadd.f32 %v948, %v968
        %v985 = vadd.f32 %v949, %v969
        %v986 = vadd.f32 %v950, %v970
        %v987 = vadd.f32 %v951, %v971
        %v988 = vadd.f32 %v952, %v972
        %v989 = vadd.f32 %v953, %v973
        %v990 = vadd.f32 %v954, %v974
        %v991 = vadd.f32 %v955, %v975
        %v992 = vadd.f32 %v956, %v976
        %v993 = vrot.slane %v868, 1
        %v994 = vrot.slane %v871, 1
        %v995 = vrot.slane %v874, 1
        %v996 = vrot.slane %v877, 1
        %v997 = vrot.slane %v880, 1
        %v998 = vrot.slane %v883, 1
        %v999 = vrot.slane %v886, 1
        %v1000 = vrot.slane %v889, 1
        %v1001 = vrot.slane %v892, 1
        %v1002 = vrot.slane %v895, 1
        %v1003 = vrot.slane %v869, 1
        %v1004 = vrot.slane %v872, 1
        %v1005 = vrot.slane %v875, 1
        %v1006 = vrot.slane %v878, 1
        %v1007 = vrot.slane %v881, 1
        %v1008 = vrot.slane %v884, 1
        %v1009 = vrot.slane %v887, 1
        %v1010 = vrot.slane %v890, 1
        %v1011 = vrot.slane %v893, 1
        %v1012 = vrot.slane %v896, 1
        %v1013 = vrot.slane %v870, 1
        %v1014 = vrot.slane %v873, 1
        %v1015 = vrot.slane %v876, 1
        %v1016 = vrot.slane %v879, 1
        %v1017 = vrot.slane %v882, 1
        %v1018 = vrot.slane %v885, 1
        %v1019 = vrot.slane %v888, 1
        %v1020 = vrot.slane %v891, 1
        %v1021 = vrot.slane %v894, 1
        %v1022 = vrot.slane %v897, 1
        %vm1023 = vcmp.lt.s32.totalorder %v709, 7
        %v1024 = vsel %vm1023, %v1003, %v1013
        %v1025 = vsel %vm1023, %v1004, %v1014
        %v1026 = vsel %vm1023, %v1005, %v1015
        %v1027 = vsel %vm1023, %v1006, %v1016
        %v1028 = vsel %vm1023, %v1007, %v1017
        %v1029 = vsel %vm1023, %v1008, %v1018
        %v1030 = vsel %vm1023, %v1009, %v1019
        %v1031 = vsel %vm1023, %v1010, %v1020
        %v1032 = vsel %vm1023, %v1011, %v1021
        %v1033 = vsel %vm1023, %v1012, %v1022
        %v1034 = vsel %vm1023, %v993, %v1003
        %v1035 = vsel %vm1023, %v994, %v1004
        %v1036 = vsel %vm1023, %v995, %v1005
        %v1037 = vsel %vm1023, %v996, %v1006
        %v1038 = vsel %vm1023, %v997, %v1007
        %v1039 = vsel %vm1023, %v998, %v1008
        %v1040 = vsel %vm1023, %v999, %v1009
        %v1041 = vsel %vm1023, %v1000, %v1010
        %v1042 = vsel %vm1023, %v1001, %v1011
        %v1043 = vsel %vm1023, %v1002, %v1012
        %v1044 = vlaneseq
        %v1045 = vshrl.u32 %v1044, 7
        %v1046 = vsub.s32 1, %v1045
        %v1047 = vrot.slane %v898, %v1046
        %v1048 = vmul.f32 %v1034, %v1047
        %v1049 = vmul.f32 %v1024, %v1047
        %v1050 = vmul.f32 %v1035, %v1047
        %v1051 = vmul.f32 %v1025, %v1047
        %v1052 = vmul.f32 %v1036, %v1047
        %v1053 = vmul.f32 %v1026, %v1047
        %v1054 = vmul.f32 %v1037, %v1047
        %v1055 = vmul.f32 %v1027, %v1047
        %v1056 = vmul.f32 %v1038, %v1047
        %v1057 = vmul.f32 %v1028, %v1047
        %v1058 = vmul.f32 %v1039, %v1047
        %v1059 = vmul.f32 %v1029, %v1047
        %v1060 = vmul.f32 %v1040, %v1047
        %v1061 = vmul.f32 %v1030, %v1047
        %v1062 = vmul.f32 %v1041, %v1047
        %v1063 = vmul.f32 %v1031, %v1047
        %v1064 = vadd.f32 %v977, %v1048
        %v1065 = vadd.f32 %v978, %v1049
        %v1066 = vadd.f32 %v979, %v1050
        %v1067 = vadd.f32 %v980, %v1051
        %v1068 = vadd.f32 %v981, %v1052
        %v1069 = vadd.f32 %v982, %v1053
        %v1070 = vadd.f32 %v983, %v1054
        %v1071 = vadd.f32 %v984, %v1055
        %v1072 = vadd.f32 %v985, %v1056
        %v1073 = vadd.f32 %v986, %v1057
        %v1074 = vadd.f32 %v987, %v1058
        %v1075 = vadd.f32 %v988, %v1059
        %v1076 = vadd.f32 %v989, %v1060
        %v1077 = vadd.f32 %v990, %v1061
        %v1078 = vadd.f32 %v991, %v1062
        %v1079 = vadd.f32 %v992, %v1063
        %v1080 = vlaneseq
        %v1081 = vshrl.u32 %v1080, 7
        %v1082 = vsub.s32 1, %v1081
        %v1083 = vrot.slane %v899, %v1082
        %v1084 = vmul.f32 %v1035, %v1083
        %v1085 = vmul.f32 %v1025, %v1083
        %v1086 = vmul.f32 %v1036, %v1083
        %v1087 = vmul.f32 %v1026, %v1083
        %v1088 = vmul.f32 %v1037, %v1083
        %v1089 = vmul.f32 %v1027, %v1083
        %v1090 = vmul.f32 %v1038, %v1083
        %v1091 = vmul.f32 %v1028, %v1083
        %v1092 = vmul.f32 %v1039, %v1083
        %v1093 = vmul.f32 %v1029, %v1083
        %v1094 = vmul.f32 %v1040, %v1083
        %v1095 = vmul.f32 %v1030, %v1083
        %v1096 = vmul.f32 %v1041, %v1083
        %v1097 = vmul.f32 %v1031, %v1083
        %v1098 = vmul.f32 %v1042, %v1083
        %v1099 = vmul.f32 %v1032, %v1083
        %v1100 = vadd.f32 %v1064, %v1084
        %v1101 = vadd.f32 %v1065, %v1085
        %v1102 = vadd.f32 %v1066, %v1086
        %v1103 = vadd.f32 %v1067, %v1087
        %v1104 = vadd.f32 %v1068, %v1088
        %v1105 = vadd.f32 %v1069, %v1089
        %v1106 = vadd.f32 %v1070, %v1090
        %v1107 = vadd.f32 %v1071, %v1091
        %v1108 = vadd.f32 %v1072, %v1092
        %v1109 = vadd.f32 %v1073, %v1093
        %v1110 = vadd.f32 %v1074, %v1094
        %v1111 = vadd.f32 %v1075, %v1095
        %v1112 = vadd.f32 %v1076, %v1096
        %v1113 = vadd.f32 %v1077, %v1097
        %v1114 = vadd.f32 %v1078, %v1098
        %v1115 = vadd.f32 %v1079, %v1099
        %v1116 = vlaneseq
        %v1117 = vshrl.u32 %v1116, 7
        %v1118 = vsub.s32 1, %v1117
        %v1119 = vrot.slane %v900, %v1118
        %v1120 = vmul.f32 %v1036, %v1119
        %v1121 = vmul.f32 %v1026, %v1119
        %v1122 = vmul.f32 %v1037, %v1119
        %v1123 = vmul.f32 %v1027, %v1119
        %v1124 = vmul.f32 %v1038, %v1119
        %v1125 = vmul.f32 %v1028, %v1119
        %v1126 = vmul.f32 %v1039, %v1119
        %v1127 = vmul.f32 %v1029, %v1119
        %v1128 = vmul.f32 %v1040, %v1119
        %v1129 = vmul.f32 %v1030, %v1119
        %v1130 = vmul.f32 %v1041, %v1119
        %v1131 = vmul.f32 %v1031, %v1119
        %v1132 = vmul.f32 %v1042, %v1119
        %v1133 = vmul.f32 %v1032, %v1119
        %v1134 = vmul.f32 %v1043, %v1119
        %v1135 = vmul.f32 %v1033, %v1119
        %v1136 = vadd.f32 %v1100, %v1120
        %v1137 = vadd.f32 %v1101, %v1121
        %v1138 = vadd.f32 %v1102, %v1122
        %v1139 = vadd.f32 %v1103, %v1123
        %v1140 = vadd.f32 %v1104, %v1124
        %v1141 = vadd.f32 %v1105, %v1125
        %v1142 = vadd.f32 %v1106, %v1126
        %v1143 = vadd.f32 %v1107, %v1127
        %v1144 = vadd.f32 %v1108, %v1128
        %v1145 = vadd.f32 %v1109, %v1129
        %v1146 = vadd.f32 %v1110, %v1130
        %v1147 = vadd.f32 %v1111, %v1131
        %v1148 = vadd.f32 %v1112, %v1132
        %v1149 = vadd.f32 %v1113, %v1133
        %v1150 = vadd.f32 %v1114, %v1134
        %v1151 = vadd.f32 %v1115, %v1135
        %v1152 = vrot.slane %v868, 2
        %v1153 = vrot.slane %v871, 2
        %v1154 = vrot.slane %v874, 2
        %v1155 = vrot.slane %v877, 2
        %v1156 = vrot.slane %v880, 2
        %v1157 = vrot.slane %v883, 2
        %v1158 = vrot.slane %v886, 2
        %v1159 = vrot.slane %v889, 2
        %v1160 = vrot.slane %v892, 2
        %v1161 = vrot.slane %v895, 2
        %v1162 = vrot.slane %v869, 2
        %v1163 = vrot.slane %v872, 2
        %v1164 = vrot.slane %v875, 2
        %v1165 = vrot.slane %v878, 2
        %v1166 = vrot.slane %v881, 2
        %v1167 = vrot.slane %v884, 2
        %v1168 = vrot.slane %v887, 2
        %v1169 = vrot.slane %v890, 2
        %v1170 = vrot.slane %v893, 2
        %v1171 = vrot.slane %v896, 2
        %v1172 = vrot.slane %v870, 2
        %v1173 = vrot.slane %v873, 2
        %v1174 = vrot.slane %v876, 2
        %v1175 = vrot.slane %v879, 2
        %v1176 = vrot.slane %v882, 2
        %v1177 = vrot.slane %v885, 2
        %v1178 = vrot.slane %v888, 2
        %v1179 = vrot.slane %v891, 2
        %v1180 = vrot.slane %v894, 2
        %v1181 = vrot.slane %v897, 2
        %vm1182 = vcmp.lt.s32.totalorder %v709, 6
        %v1183 = vsel %vm1182, %v1162, %v1172
        %v1184 = vsel %vm1182, %v1163, %v1173
        %v1185 = vsel %vm1182, %v1164, %v1174
        %v1186 = vsel %vm1182, %v1165, %v1175
        %v1187 = vsel %vm1182, %v1166, %v1176
        %v1188 = vsel %vm1182, %v1167, %v1177
        %v1189 = vsel %vm1182, %v1168, %v1178
        %v1190 = vsel %vm1182, %v1169, %v1179
        %v1191 = vsel %vm1182, %v1170, %v1180
        %v1192 = vsel %vm1182, %v1171, %v1181
        %v1193 = vsel %vm1182, %v1152, %v1162
        %v1194 = vsel %vm1182, %v1153, %v1163
        %v1195 = vsel %vm1182, %v1154, %v1164
        %v1196 = vsel %vm1182, %v1155, %v1165
        %v1197 = vsel %vm1182, %v1156, %v1166
        %v1198 = vsel %vm1182, %v1157, %v1167
        %v1199 = vsel %vm1182, %v1158, %v1168
        %v1200 = vsel %vm1182, %v1159, %v1169
        %v1201 = vsel %vm1182, %v1160, %v1170
        %v1202 = vsel %vm1182, %v1161, %v1171
        %v1203 = vlaneseq
        %v1204 = vshrl.u32 %v1203, 7
        %v1205 = vsub.s32 2, %v1204
        %v1206 = vrot.slane %v898, %v1205
        %v1207 = vmul.f32 %v1193, %v1206
        %v1208 = vmul.f32 %v1183, %v1206
        %v1209 = vmul.f32 %v1194, %v1206
        %v1210 = vmul.f32 %v1184, %v1206
        %v1211 = vmul.f32 %v1195, %v1206
        %v1212 = vmul.f32 %v1185, %v1206
        %v1213 = vmul.f32 %v1196, %v1206
        %v1214 = vmul.f32 %v1186, %v1206
        %v1215 = vmul.f32 %v1197, %v1206
        %v1216 = vmul.f32 %v1187, %v1206
        %v1217 = vmul.f32 %v1198, %v1206
        %v1218 = vmul.f32 %v1188, %v1206
        %v1219 = vmul.f32 %v1199, %v1206
        %v1220 = vmul.f32 %v1189, %v1206
        %v1221 = vmul.f32 %v1200, %v1206
        %v1222 = vmul.f32 %v1190, %v1206
        %v1223 = vadd.f32 %v1136, %v1207
        %v1224 = vadd.f32 %v1137, %v1208
        %v1225 = vadd.f32 %v1138, %v1209
        %v1226 = vadd.f32 %v1139, %v1210
        %v1227 = vadd.f32 %v1140, %v1211
        %v1228 = vadd.f32 %v1141, %v1212
        %v1229 = vadd.f32 %v1142, %v1213
        %v1230 = vadd.f32 %v1143, %v1214
        %v1231 = vadd.f32 %v1144, %v1215
        %v1232 = vadd.f32 %v1145, %v1216
        %v1233 = vadd.f32 %v1146, %v1217
        %v1234 = vadd.f32 %v1147, %v1218
        %v1235 = vadd.f32 %v1148, %v1219
        %v1236 = vadd.f32 %v1149, %v1220
        %v1237 = vadd.f32 %v1150, %v1221
        %v1238 = vadd.f32 %v1151, %v1222
        %v1239 = vlaneseq
        %v1240 = vshrl.u32 %v1239, 7
        %v1241 = vsub.s32 2, %v1240
        %v1242 = vrot.slane %v899, %v1241
        %v1243 = vmul.f32 %v1194, %v1242
        %v1244 = vmul.f32 %v1184, %v1242
        %v1245 = vmul.f32 %v1195, %v1242
        %v1246 = vmul.f32 %v1185, %v1242
        %v1247 = vmul.f32 %v1196, %v1242
        %v1248 = vmul.f32 %v1186, %v1242
        %v1249 = vmul.f32 %v1197, %v1242
        %v1250 = vmul.f32 %v1187, %v1242
        %v1251 = vmul.f32 %v1198, %v1242
        %v1252 = vmul.f32 %v1188, %v1242
        %v1253 = vmul.f32 %v1199, %v1242
        %v1254 = vmul.f32 %v1189, %v1242
        %v1255 = vmul.f32 %v1200, %v1242
        %v1256 = vmul.f32 %v1190, %v1242
        %v1257 = vmul.f32 %v1201, %v1242
        %v1258 = vmul.f32 %v1191, %v1242
        %v1259 = vadd.f32 %v1223, %v1243
        %v1260 = vadd.f32 %v1224, %v1244
        %v1261 = vadd.f32 %v1225, %v1245
        %v1262 = vadd.f32 %v1226, %v1246
        %v1263 = vadd.f32 %v1227, %v1247
        %v1264 = vadd.f32 %v1228, %v1248
        %v1265 = vadd.f32 %v1229, %v1249
        %v1266 = vadd.f32 %v1230, %v1250
        %v1267 = vadd.f32 %v1231, %v1251
        %v1268 = vadd.f32 %v1232, %v1252
        %v1269 = vadd.f32 %v1233, %v1253
        %v1270 = vadd.f32 %v1234, %v1254
        %v1271 = vadd.f32 %v1235, %v1255
        %v1272 = vadd.f32 %v1236, %v1256
        %v1273 = vadd.f32 %v1237, %v1257
        %v1274 = vadd.f32 %v1238, %v1258
        %v1275 = vlaneseq
        %v1276 = vshrl.u32 %v1275, 7
        %v1277 = vsub.s32 2, %v1276
        %v1278 = vrot.slane %v900, %v1277
        %v1279 = vmul.f32 %v1195, %v1278
        %v1280 = vmul.f32 %v1185, %v1278
        %v1281 = vmul.f32 %v1196, %v1278
        %v1282 = vmul.f32 %v1186, %v1278
        %v1283 = vmul.f32 %v1197, %v1278
        %v1284 = vmul.f32 %v1187, %v1278
        %v1285 = vmul.f32 %v1198, %v1278
        %v1286 = vmul.f32 %v1188, %v1278
        %v1287 = vmul.f32 %v1199, %v1278
        %v1288 = vmul.f32 %v1189, %v1278
        %v1289 = vmul.f32 %v1200, %v1278
        %v1290 = vmul.f32 %v1190, %v1278
        %v1291 = vmul.f32 %v1201, %v1278
        %v1292 = vmul.f32 %v1191, %v1278
        %v1293 = vmul.f32 %v1202, %v1278
        %v1294 = vmul.f32 %v1192, %v1278
        %v1295 = vadd.f32 %v1259, %v1279
        %v1296 = vadd.f32 %v1260, %v1280
        %v1297 = vadd.f32 %v1261, %v1281
        %v1298 = vadd.f32 %v1262, %v1282
        %v1299 = vadd.f32 %v1263, %v1283
        %v1300 = vadd.f32 %v1264, %v1284
        %v1301 = vadd.f32 %v1265, %v1285
        %v1302 = vadd.f32 %v1266, %v1286
        %v1303 = vadd.f32 %v1267, %v1287
        %v1304 = vadd.f32 %v1268, %v1288
        %v1305 = vadd.f32 %v1269, %v1289
        %v1306 = vadd.f32 %v1270, %v1290
        %v1307 = vadd.f32 %v1271, %v1291
        %v1308 = vadd.f32 %v1272, %v1292
        %v1309 = vadd.f32 %v1273, %v1293
        %v1310 = vadd.f32 %v1274, %v1294
        %v1311 = vld [vmem:[%s372] sm:$0x1]
        %v1313 = vlaneseq
        %v1314 = vshrl.u32 %v1313, 7
        %v1315 = vsub.s32 0, %v1314
        %v1316 = vrot.slane %v1311, %v1315
        %v1318 = vadd.f32 %v1295, %v1316
        %v1319 = vadd.f32 %v1296, %v1316
        %v1320 = vadd.f32 %v1297, %v1316
        %v1321 = vadd.f32 %v1298, %v1316
        %v1322 = vadd.f32 %v1299, %v1316
        %v1323 = vadd.f32 %v1300, %v1316
        %v1324 = vadd.f32 %v1301, %v1316
        %v1325 = vadd.f32 %v1302, %v1316
        %v1326 = vadd.f32 %v1303, %v1316
        %v1327 = vadd.f32 %v1304, %v1316
        %v1328 = vadd.f32 %v1305, %v1316
        %v1329 = vadd.f32 %v1306, %v1316
        %v1330 = vadd.f32 %v1307, %v1316
        %v1331 = vadd.f32 %v1308, %v1316
        %v1332 = vadd.f32 %v1309, %v1316
        %v1333 = vadd.f32 %v1310, %v1316
        %v1334 = vmax.f32 %v1318, 0.0
        %v1335 = vmax.f32 %v1319, 0.0
        %v1336 = vmax.f32 %v1320, 0.0
        %v1337 = vmax.f32 %v1321, 0.0
        %v1338 = vmax.f32 %v1322, 0.0
        %v1339 = vmax.f32 %v1323, 0.0
        %v1340 = vmax.f32 %v1324, 0.0
        %v1341 = vmax.f32 %v1325, 0.0
        %v1342 = vmax.f32 %v1326, 0.0
        %v1343 = vmax.f32 %v1327, 0.0
        %v1344 = vmax.f32 %v1328, 0.0
        %v1345 = vmax.f32 %v1329, 0.0
        %v1346 = vmax.f32 %v1330, 0.0
        %v1347 = vmax.f32 %v1331, 0.0
        %v1348 = vmax.f32 %v1332, 0.0
        %v1349 = vmax.f32 %v1333, 0.0
        %v1350 = vmin.f32 %v1334, 6.0
        %v1351 = vmin.f32 %v1335, 6.0
        %v1352 = vmin.f32 %v1336, 6.0
        %v1353 = vmin.f32 %v1337, 6.0
        %v1354 = vmin.f32 %v1338, 6.0
        %v1355 = vmin.f32 %v1339, 6.0
        %v1356 = vmin.f32 %v1340, 6.0
        %v1357 = vmin.f32 %v1341, 6.0
        %v1358 = vmin.f32 %v1342, 6.0
        %v1359 = vmin.f32 %v1343, 6.0
        %v1360 = vmin.f32 %v1344, 6.0
        %v1361 = vmin.f32 %v1345, 6.0
        %v1362 = vmin.f32 %v1346, 6.0
        %v1363 = vmin.f32 %v1347, 6.0
        %v1364 = vmin.f32 %v1348, 6.0
        %v1365 = vmin.f32 %v1349, 6.0
        %v1366 = vpack.c.bf16 %v1351, %v1350
        %v1367 = vpack.c.bf16 %v1353, %v1352
        %v1368 = vpack.c.bf16 %v1355, %v1354
        %v1369 = vpack.c.bf16 %v1357, %v1356
        %v1370 = vpack.c.bf16 %v1359, %v1358
        %v1371 = vpack.c.bf16 %v1361, %v1360
        %v1372 = vpack.c.bf16 %v1363, %v1362
        %v1373 = vpack.c.bf16 %v1365, %v1364
        %v1374 = vld [vmem:[%s376] sm:$0x3]
        %vm1375 = vcmask 195584
        %v1377 = vsel %vm1375, %v1374, 0
        %v1380 = vsel %vm1375, %v1366, 0
        %v1383 = vsel %vm1375, %v1367, 0
        %v1386 = vsel %vm1375, %v1368, 0
        %v1389 = vsel %vm1375, %v1369, 0
        %v1392 = vsel %vm1375, %v1370, 0
        %v1395 = vsel %vm1375, %v1371, 0
        %v1398 = vsel %vm1375, %v1372, 0
        %v1401 = vsel %vm1375, %v1373, 0
        %1403 = vmatprep.subr.bf16.mxu0 0
        %1404 = vmatpush1.bf16.xpose.msra.mxu0 %v1380
        %1405 = vmatprep.subr.bf16.mxu0 0
        %1406 = vmatpush1.bf16.xpose.msra.mxu0 %v1383
        %1407 = vmatprep.subr.bf16.mxu0 0
        %1408 = vmatpush1.bf16.xpose.msra.mxu0 %v1386
        %1409 = vmatprep.subr.bf16.mxu0 0
        %1410 = vmatpush1.bf16.xpose.msra.mxu0 %v1389
        %1411 = vmatprep.subr.bf16.mxu0 0
        %1412 = vmatpush1.bf16.xpose.msra.mxu0 %v1392
        %1413 = vmatprep.subr.bf16.mxu0 0
        %1414 = vmatpush1.bf16.xpose.msra.mxu0 %v1395
        %1415 = vmatprep.subr.bf16.mxu0 0
        %1416 = vmatpush1.bf16.xpose.msra.mxu0 %v1398
        %1417 = vmatprep.subr.bf16.mxu0 0
        %1418 = vmatpush1.bf16.xpose.msra.mxu0 %v1401
        %1419 = vmatprep.subr.bf16.mxu0 0
        %1420 = vmatpush1.bf16.xpose.msra.mxu0 0
        %1421 = vmatprep.subr.bf16.mxu0 0
        %1422 = vmatpush1.bf16.xpose.msra.mxu0 0
        %1423 = vmatprep.subr.bf16.mxu0 0
        %1424 = vmatpush1.bf16.xpose.msra.mxu0 0
        %1425 = vmatprep.subr.bf16.mxu0 0
        %1426 = vmatpush1.bf16.xpose.msra.mxu0 0
        %1427 = vmatprep.subr.bf16.mxu0 0
        %1428 = vmatpush1.bf16.xpose.msra.mxu0 0
        %1429 = vmatprep.subr.bf16.mxu0 0
        %1430 = vmatpush1.bf16.xpose.msra.mxu0 0
        %1431 = vmatprep.subr.bf16.mxu0 0
        %1432 = vmatpush1.bf16.xpose.msra.mxu0 0
        %1433 = vmatprep.subr.bf16.mxu0 0
        %1434 = vmatpush1.bf16.xpose.msra.mxu0 0
        %1435 = vmatprep.mubr.bf16.mxu0 0
        %1436 = vmatmul.mubr.bf16.gmra.mrb[0].mxu0 %v1377
        %v1437 = vpop.f32.mrb[0].mxu0
        %v1438 = vadd.f32 0.0, %v1437
        %v1439 = vpop.f32.mrb[0].mxu0
        %v1440 = vpop.f32.mrb[0].mxu0
        %v1441 = vpop.f32.mrb[0].mxu0
        %1442 = vdwg.mxu0
        %p1443 = scmp.eq.s32.totalorder %s28, 0
        // Predicated region
        $region49: #{tpu_custom_call.1} parent=47 // pred_check
          %p1444 = pneg %p1443
        $region50: #{tpu_custom_call.1} parent=47 // pred_check_branch
          %1446 = sbr.rel (%p1444) target = $region52
        $region51: #{tpu_custom_call.1} parent=47 // pred_region
          %1447 = vst [vmem:[%s353] sm:$0xf] 0.0
        $region52: #{tpu_custom_call.1} parent=47 // pred_fallthru
          _
        %v1448 = vld [vmem:[%s353] sm:$0xf]
        %v1449 = vadd.f32 %v1448, %v1438
        %1450 = vst [vmem:[%s353] sm:$0xf] %v1449
        // Predicated region
        $region53: #{tpu_custom_call.1} parent=47 // pred_check
          %p1451 = pneg %p1443
        $region54: #{tpu_custom_call.1} parent=47 // pred_check_branch
          %1453 = sbr.rel (%p1451) target = $region56
        $region55: #{tpu_custom_call.1} parent=47 // pred_region
          %v1454 = vld [vmem:[%s6] sm:$0xf]
          %vm1479 = vcmask 1046528
          %v1480 = vrot.slane %v384, 1
          %v1481 = vrot.slane %v385, 1
          %v1482 = vsel %vm1479, %v1480, %v1481
          %v1483 = vrot.slane %v386, 1
          %v1484 = vsel %vm1479, %v1481, %v1483
          %v1485 = vrot.slane %v387, 1
          %v1486 = vrot.slane %v388, 1
          %v1487 = vsel %vm1479, %v1485, %v1486
          %v1488 = vrot.slane %v389, 1
          %v1489 = vsel %vm1479, %v1486, %v1488
          %v1490 = vrot.slane %v390, 1
          %v1491 = vrot.slane %v391, 1
          %v1492 = vsel %vm1479, %v1490, %v1491
          %v1493 = vrot.slane %v392, 1
          %v1494 = vsel %vm1479, %v1491, %v1493
          %v1495 = vrot.slane %v393, 1
          %v1496 = vrot.slane %v394, 1
          %v1497 = vsel %vm1479, %v1495, %v1496
          %v1498 = vrot.slane %v395, 1
          %v1499 = vsel %vm1479, %v1496, %v1498
          %v1500 = vrot.slane %v396, 1
          %v1501 = vrot.slane %v397, 1
          %v1502 = vsel %vm1479, %v1500, %v1501
          %v1503 = vrot.slane %v398, 1
          %v1504 = vsel %vm1479, %v1501, %v1503
          %v1505 = vrot.slane %v399, 1
          %v1506 = vrot.slane %v400, 1
          %v1507 = vsel %vm1479, %v1505, %v1506
          %v1508 = vrot.slane %v401, 1
          %v1509 = vsel %vm1479, %v1506, %v1508
          %v1510 = vrot.slane %v402, 1
          %v1511 = vrot.slane %v403, 1
          %v1512 = vsel %vm1479, %v1510, %v1511
          %v1513 = vrot.slane %v404, 1
          %v1514 = vsel %vm1479, %v1511, %v1513
          %v1515 = vrot.slane %v405, 1
          %v1516 = vrot.slane %v406, 1
          %v1517 = vsel %vm1479, %v1515, %v1516
          %v1518 = vrot.slane %v407, 1
          %v1519 = vsel %vm1479, %v1516, %v1518
          %v1520 = vlaneseq
          %v1521 = vand.u32 %v1520, 127
          %vm1522 = vcmp.eq.s32.totalorder %v709, %v1521
          %v1523 = vsel %vm1522, 1.0, 0.0
          %v1525 = vsel %vm434, %v1523, 0
          %v1527 = vsel %vm434, %v1482, 0
          %v1529 = vsel %vm434, %v1484, 0
          %v1531 = vsel %vm434, %v1487, 0
          %v1533 = vsel %vm434, %v1489, 0
          %v1535 = vsel %vm434, %v1492, 0
          %v1537 = vsel %vm434, %v1494, 0
          %v1539 = vsel %vm434, %v1497, 0
          %v1541 = vsel %vm434, %v1499, 0
          %v1543 = vsel %vm434, %v1502, 0
          %v1545 = vsel %vm434, %v1504, 0
          %v1547 = vsel %vm434, %v1507, 0
          %v1549 = vsel %vm434, %v1509, 0
          %v1551 = vsel %vm434, %v1512, 0
          %v1553 = vsel %vm434, %v1514, 0
          %v1555 = vsel %vm434, %v1517, 0
          %v1557 = vsel %vm434, %v1519, 0
          %1559 = vmatprep.subr.mxu0 0.0
          %1560 = vmatpush1.xpose.msra.mxu0 %v1527
          %1561 = vmatprep.subr.mxu0 0.0
          %1562 = vmatpush1.xpose.msra.mxu0 %v1529
          %1563 = vmatprep.subr.mxu0 0.0
          %1564 = vmatpush1.xpose.msra.mxu0 %v1531
          %1565 = vmatprep.subr.mxu0 0.0
          %1566 = vmatpush1.xpose.msra.mxu0 %v1533
          %1567 = vmatprep.subr.mxu0 0.0
          %1568 = vmatpush1.xpose.msra.mxu0 %v1535
          %1569 = vmatprep.subr.mxu0 0.0
          %1570 = vmatpush1.xpose.msra.mxu0 %v1537
          %1571 = vmatprep.subr.mxu0 0.0
          %1572 = vmatpush1.xpose.msra.mxu0 %v1539
          %1573 = vmatprep.subr.mxu0 0.0
          %1574 = vmatpush1.xpose.msra.mxu0 %v1541
          %1575 = vmatprep.subr.mxu0 0.0
          %1576 = vmatpush1.xpose.msra.mxu0 %v1543
          %1577 = vmatprep.subr.mxu0 0.0
          %1578 = vmatpush1.xpose.msra.mxu0 %v1545
          %1579 = vmatprep.subr.mxu0 0.0
          %1580 = vmatpush1.xpose.msra.mxu0 %v1547
          %1581 = vmatprep.subr.mxu0 0.0
          %1582 = vmatpush1.xpose.msra.mxu0 %v1549
          %1583 = vmatprep.subr.mxu0 0.0
          %1584 = vmatpush1.xpose.msra.mxu0 %v1551
          %1585 = vmatprep.subr.mxu0 0.0
          %1586 = vmatpush1.xpose.msra.mxu0 %v1553
          %1587 = vmatprep.subr.mxu0 0.0
          %1588 = vmatpush1.xpose.msra.mxu0 %v1555
          %1589 = vmatprep.subr.mxu0 0.0
          %1590 = vmatpush1.xpose.msra.mxu0 %v1557
          %1591 = vmatprep.subr.mxu0 0.0
          %1592 = vmatpush1.xpose.msra.mxu0 0.0
          %1593 = vmatprep.subr.mxu0 0.0
          %1594 = vmatpush1.xpose.msra.mxu0 0.0
          %1595 = vmatprep.subr.mxu0 0.0
          %1596 = vmatpush1.xpose.msra.mxu0 0.0
          %1597 = vmatprep.subr.mxu0 0.0
          %1598 = vmatpush1.xpose.msra.mxu0 0.0
          %1599 = vmatprep.subr.mxu0 0.0
          %1600 = vmatpush1.xpose.msra.mxu0 0.0
          %1601 = vmatprep.subr.mxu0 0.0
          %1602 = vmatpush1.xpose.msra.mxu0 0.0
          %1603 = vmatprep.subr.mxu0 0.0
          %1604 = vmatpush1.xpose.msra.mxu0 0.0
          %1605 = vmatprep.subr.mxu0 0.0
          %1606 = vmatpush1.xpose.msra.mxu0 0.0
          %1607 = vmatprep.subr.mxu0 0.0
          %1608 = vmatpush1.xpose.msra.mxu0 0.0
          %1609 = vmatprep.subr.mxu0 0.0
          %1610 = vmatpush1.xpose.msra.mxu0 0.0
          %1611 = vmatprep.subr.mxu0 0.0
          %1612 = vmatpush1.xpose.msra.mxu0 0.0
          %1613 = vmatprep.subr.mxu0 0.0
          %1614 = vmatpush1.xpose.msra.mxu0 0.0
          %1615 = vmatprep.subr.mxu0 0.0
          %1616 = vmatpush1.xpose.msra.mxu0 0.0
          %1617 = vmatprep.subr.mxu0 0.0
          %1618 = vmatpush1.xpose.msra.mxu0 0.0
          %1619 = vmatprep.subr.mxu0 0.0
          %1620 = vmatpush1.xpose.msra.mxu0 0.0
          %1621 = vmatprep.subr.mxu0 0.0
          %1622 = vmatpush1.xpose.msra.mxu0 0.0
          %1623 = vmatprep.mubr.f32.mxu0 0.0
          %1624 = vmatmul.mubr.f32.gmra.mrb[0].mxu0 %v1525
          %v1625 = vpop.f32.mrb[0].mxu0
          %v1626 = vadd.f32 0.0, %v1625
          %v1627 = vpop.f32.mrb[0].mxu0
          %1628 = vdwg.mxu0
          %1630 = vset.pattern.permute.xlu0 0
          %1631 = vperm.xlu0 %1630, %v1454
          %v1632 = vpop.permute.xlu0 %1631
          %v1634 = vadd.f32 %v1632, %v1626
          %v1635 = vld [vmem:[%s353] sm:$0xf]
          %v1636 = vadd.f32 %v1635, %v1634
          %1637 = vst [vmem:[%s353] sm:$0xf] %v1636
        $region56: #{tpu_custom_call.1} parent=47 // pred_fallthru
          _
        %s1638 = sand.u32 %s227, 1
        %s1639 = scalar_lea.sflag [#allocation3], %s1638
        %s1640 = sand.u32 %s227, 1
        %s1641 = smul.addr %s1640, 4
        %s1642 = scalar_lea.vmem [#allocation2], %s1641
        // Predicated region
        $region57: #{tpu_custom_call.1} parent=47 // pred_check
          %p1643 = pneg %p237
        $region58: #{tpu_custom_call.1} parent=47 // pred_check_branch
          %1645 = sbr.rel (%p1643) target = $region60
        $region59: #{tpu_custom_call.1} parent=47 // pred_region
          %s1647 = ssub.s32 64, 64
          %1648 = vsyncadd %s1639, %s1647
          %s1649 = smul.addr %s26, 2
          %s1650 = sadd.s32 %s27, %s1649
          %s1651 = smul.addr %s1650, 64
          %s1652 = scalar_lea.hbm %s7, %s1651
          %s1654 = sshll.u32 %s1642, 4
          %s1655 = int_to_ptr.vmem [resolvable:$true] %s1654
          %1657 = dma.vmem_to_hbm [thread:$0]  %s1655, 64, %s1652, %s1639
        $region60: #{tpu_custom_call.1} parent=47 // pred_fallthru
          _
      $region48: #{tpu_custom_call.1} parent=5 // pred_fallthru
        _
      %p1658 = scmp.le.s32.totalorder 2, %s16
      // Predicated region
      $region61: #{tpu_custom_call.1} parent=5 // pred_check
        %p1659 = pneg %p1658
      $region62: #{tpu_custom_call.1} parent=5 // pred_check_branch
        %1661 = sbr.rel (%p1659) target = $region64
      $region63: #{tpu_custom_call.1} parent=5 // pred_region
        %s1662 = ssub.s32 %s16, 2
        // Predicated region
        $region65: #{tpu_custom_call.1} parent=63 // pred_check
          %p1663 = pneg %p243
        $region66: #{tpu_custom_call.1} parent=63 // pred_check_branch
          %1665 = sbr.rel (%p1663) target = $region68
        $region67: #{tpu_custom_call.1} parent=63 // pred_region
          %s1666 = sand.u32 %s228, 1
          %s1667 = scalar_lea.sflag [#allocation3], %s1666
          %s1668 = sand.u32 %s228, 1
          %s1669 = smul.addr %s1668, 4
          %s1670 = scalar_lea.vmem [#allocation2], %s1669
          %1671 = dma.done %s1667, 64
        $region68: #{tpu_custom_call.1} parent=63 // pred_fallthru
          _
      $region64: #{tpu_custom_call.1} parent=5 // pred_fallthru
        _
    $region6: #{tpu_custom_call.1} parent=1 // loop_footer
      %s20 = sadd.s32 1, %s16
    $region7: #{tpu_custom_call.1} parent=1 // loop_footer_branch
      %15 = sbr.rel target = $region3
    $region8: #{tpu_custom_call.1} parent=1 // loop_exit
      _
    %1672 = vsyncpa [#allocation3], 1
    %s1673 = scalar_lea.sflag [#allocation3], 1
    %1674 = vsyncpa %s1673, 1

</llo_original>
